<compile_context>
chip_gen: v6e
topology: v6e:2x2x1
jax: 0.10.0
libtpu: 0.0.40
codegen_flags: <defaults>
</compile_context>

<pallas_src>
import jax
import jax.numpy as jnp
from jax.experimental import pallas as pl
from jax.experimental.pallas import tpu as pltpu


LANE = 128  # TPU lane width


def _round_up(v, m):
    return ((v + m - 1) // m) * m


def mlp_kernel(x_ref,
               w1_ref, b1_ref, w2_ref, b2_ref, w3_ref, b3_ref,
               w4_ref, b4_ref, w5_ref, b5_ref,
               o_ref):
    """Entire 5-layer MLP hot path on one VMEM-resident batch tile.

    bf16 operands on the MXU, f32 accumulation; bias-add + ReLU in f32, then
    cast back to bf16 for the next layer.  Final logits stored in f32.
    """
    h = x_ref[...].astype(jnp.bfloat16)  # in-kernel cast: input DMA'd once as f32

    def layer(h, w_ref, b_ref, relu=True):
        acc = jnp.dot(h, w_ref[...], preferred_element_type=jnp.float32) + b_ref[...]
        if relu:
            return jnp.maximum(acc, 0.0).astype(jnp.bfloat16)
        return acc

    h = layer(h, w1_ref, b1_ref)
    h = layer(h, w2_ref, b2_ref)
    h = layer(h, w3_ref, b3_ref)
    h = layer(h, w4_ref, b4_ref)
    # Final layer: no ReLU (logits); columns 10..127 are zero-padded weights.
    o_ref[...] = layer(h, w5_ref, b5_ref, relu=False)


def init_params(key):
    """Deterministic init mimicking PyTorch Linear default U(-1/sqrt(fan_in), +)."""
    dims = [(784, 512), (512, 256), (256, 128), (128, 64), (64, 10)]
    params = []
    for fan_in, fan_out in dims:
        key, kw, kb = jax.random.split(key, 3)
        bound = 1.0 / float(fan_in) ** 0.5
        w = jax.random.uniform(kw, (fan_in, fan_out), jnp.float32, -bound, bound)
        b = jax.random.uniform(kb, (1, fan_out), jnp.float32, -bound, bound)
        params.append((w, b))
    return params


def _prepare_params(params):
    """bf16 weights, f32 biases; zero-pad the narrow tail layers up to 128 lanes.

    Padding is exact: padded hidden columns are relu(0 + 0) = 0 and padded
    logit columns are sliced off in the wrapper.  Layer-0's K stays 784
    (no useless K pad: same number of MXU passes, less DMA).
    """
    prepared = []
    prev_out_pad = None
    for li, (w, b) in enumerate(params):
        fan_in, fan_out = w.shape
        in_pad = fan_in if li == 0 else prev_out_pad
        out_pad = _round_up(fan_out, LANE)
        w = jnp.pad(w, ((0, in_pad - fan_in), (0, out_pad - fan_out))).astype(jnp.bfloat16)
        b = jnp.pad(b.reshape(1, -1), ((0, 0), (0, out_pad - fan_out))).astype(jnp.float32)
        prepared += [w, b]
        prev_out_pad = out_pad
    return prepared


def net_forward(x, params, *, batch_tile=512):
    """x: (N, 1, 28, 28) or anything flattening to (N, 784). Returns (N, 10) f32."""
    x2 = x.reshape(-1, 784).astype(jnp.float32)
    n = x2.shape[0]

    # Adaptive batch tile: never pad a tiny batch up to 512 rows; keep the tile
    # a multiple of 8 (sublanes); 512 is a multiple of both 128 (v5e MXU) and
    # 256 (v6e/v7x MXU).
    bt = min(batch_tile, _round_up(n, 8))
    # Give v7x's 2 TensorCores at least 2 grid steps when the batch allows.
    if n >= 512 and pl.cdiv(n, bt) < 2:
        bt = _round_up(pl.cdiv(n, 2), 8)
    n_pad = pl.cdiv(n, bt) * bt
    if n_pad != n:
        # At most bt-1 zero rows; they are exact (zeros) and sliced off below.
        # TODO(synk): for large ragged N a masked store on the last grid step
        # would avoid this wrapper-side copy entirely.
        x2 = jnp.pad(x2, ((0, n_pad - n), (0, 0)))

    padded_args = _prepare_params(params)
    out_width = padded_args[-1].shape[-1]  # 128: lane-dense logits block

    # Grid-invariant weights/biases: full-extent blocks with a constant
    # index_map (never re-fetched across grid steps) and single-buffered
    # (no dead double-buffer VMEM).
    weight_specs = [
        pl.BlockSpec(a.shape, lambda i: (0, 0), pipeline_mode=pl.Buffered(1))
        for a in padded_args
    ]

    out = pl.pallas_call(
        mlp_kernel,
        out_shape=jax.ShapeDtypeStruct((n_pad, out_width), jnp.float32),
        grid_spec=pltpu.PrefetchScalarGridSpec(
            num_scalar_prefetch=0,
            grid=(n_pad // bt,),
            in_specs=[pl.BlockSpec((bt, 784), lambda i: (i, 0))] + weight_specs,
            out_specs=pl.BlockSpec((bt, out_width), lambda i: (i, 0)),
        ),
        compiler_params=pltpu.CompilerParams(
            dimension_semantics=("parallel",),
            vmem_limit_bytes=32 * 1024 * 1024,
        ),
    )(x2, *padded_args)
    return out[:n, :10]


def net_forward_ref(x, params):
    """Pure-JAX f32 reference for correctness check."""
    h = x.reshape(-1, 784).astype(jnp.float32)
    for i, (w, b) in enumerate(params):
        h = h @ w + b.reshape(1, -1)
        if i < len(params) - 1:
            h = jnp.maximum(h, 0.0)
    return h


if __name__ == "__main__":
    key = jax.random.PRNGKey(0)
    key, kx = jax.random.split(key)
    params = init_params(key)

    # MNIST-like small batch: (N, C, H, W) = (2, 1, 28, 28)
    x = jax.random.normal(kx, (2, 1, 28, 28), dtype=jnp.float32)

    out = net_forward(x, params)
    out = jax.block_until_ready(out)

    ref = net_forward_ref(x, params)
    assert out.shape == (2, 10), out.shape
    # bf16 MXU operands with f32 accumulation: loosen tolerance vs f32 ref.
    assert jnp.allclose(out, ref, atol=3e-2, rtol=3e-2), "mismatch vs reference"

    print("KERNEL_OK")
</pallas_src>

<mosaic_0001>
module attributes {stable_mosaic.version = 11 : i64} {
  func.func @mlp_kernel(%arg0: i32, %arg1: memref<8x784xf32, #tpu.memory_space<vmem>>, %arg2: memref<784x512xbf16, #tpu.memory_space<vmem>>, %arg3: memref<1x512xf32, #tpu.memory_space<vmem>>, %arg4: memref<512x256xbf16, #tpu.memory_space<vmem>>, %arg5: memref<1x256xf32, #tpu.memory_space<vmem>>, %arg6: memref<256x128xbf16, #tpu.memory_space<vmem>>, %arg7: memref<1x128xf32, #tpu.memory_space<vmem>>, %arg8: memref<128x128xbf16, #tpu.memory_space<vmem>>, %arg9: memref<1x128xf32, #tpu.memory_space<vmem>>, %arg10: memref<128x128xbf16, #tpu.memory_space<vmem>>, %arg11: memref<1x128xf32, #tpu.memory_space<vmem>>, %arg12: memref<8x128xf32, #tpu.memory_space<vmem>>) attributes {dimension_semantics = [#tpu.dimension_semantics<parallel>], iteration_bounds = array<i64: 1>, scalar_prefetch = 0 : i64, scratch_operands = 0 : i64, tpu.core_type = #tpu.core_type<tc>, window_params = [{transform_indices = @transform_0, window_bounds = array<i64: 8, 784>}, {pipeline_mode = #tpu.pipeline_mode<synchronous>, transform_indices = @transform_1, window_bounds = array<i64: 784, 512>}, {pipeline_mode = #tpu.pipeline_mode<synchronous>, transform_indices = @transform_2, window_bounds = array<i64: 1, 512>}, {pipeline_mode = #tpu.pipeline_mode<synchronous>, transform_indices = @transform_3, window_bounds = array<i64: 512, 256>}, {pipeline_mode = #tpu.pipeline_mode<synchronous>, transform_indices = @transform_4, window_bounds = array<i64: 1, 256>}, {pipeline_mode = #tpu.pipeline_mode<synchronous>, transform_indices = @transform_5, window_bounds = array<i64: 256, 128>}, {pipeline_mode = #tpu.pipeline_mode<synchronous>, transform_indices = @transform_6, window_bounds = array<i64: 1, 128>}, {pipeline_mode = #tpu.pipeline_mode<synchronous>, transform_indices = @transform_7, window_bounds = array<i64: 128, 128>}, {pipeline_mode = #tpu.pipeline_mode<synchronous>, transform_indices = @transform_8, window_bounds = array<i64: 1, 128>}, {pipeline_mode = #tpu.pipeline_mode<synchronous>, transform_indices = @transform_9, window_bounds = array<i64: 128, 128>}, {pipeline_mode = #tpu.pipeline_mode<synchronous>, transform_indices = @transform_10, window_bounds = array<i64: 1, 128>}, {transform_indices = @transform_11, window_bounds = array<i64: 8, 128>}]} {
    %c0 = arith.constant 0 : index
    %c0_0 = arith.constant 0 : index
    %0 = vector.load %arg1[%c0, %c0_0] : memref<8x784xf32, #tpu.memory_space<vmem>>, vector<8x784xf32>
    %1 = arith.truncf %0 : vector<8x784xf32> to vector<8x784xbf16>
    %c0_1 = arith.constant 0 : index
    %c0_2 = arith.constant 0 : index
    %2 = vector.load %arg2[%c0_1, %c0_2] : memref<784x512xbf16, #tpu.memory_space<vmem>>, vector<784x512xbf16>
    %cst = arith.constant dense<0.000000e+00> : vector<8x512xf32>
    %3 = tpu.matmul %1, %2, %cst {dimension_numbers = #tpu.dot_dimension_numbers<[1], [0], [0], [1], [0, 0, 1, 1], [], []>} : vector<8x784xbf16>, vector<784x512xbf16>, vector<8x512xf32> -> vector<8x512xf32>
    %c0_3 = arith.constant 0 : index
    %c0_4 = arith.constant 0 : index
    %4 = vector.load %arg3[%c0_3, %c0_4] : memref<1x512xf32, #tpu.memory_space<vmem>>, vector<1x512xf32>
    %5 = vector.broadcast %4 : vector<1x512xf32> to vector<8x512xf32>
    %6 = arith.addf %3, %5 : vector<8x512xf32>
    %cst_5 = arith.constant 0.000000e+00 : f32
    %7 = vector.broadcast %cst_5 : f32 to vector<8x512xf32>
    %8 = arith.maximumf %6, %7 : vector<8x512xf32>
    %9 = arith.truncf %8 : vector<8x512xf32> to vector<8x512xbf16>
    %c0_6 = arith.constant 0 : index
    %c0_7 = arith.constant 0 : index
    %10 = vector.load %arg4[%c0_6, %c0_7] : memref<512x256xbf16, #tpu.memory_space<vmem>>, vector<512x256xbf16>
    %cst_8 = arith.constant dense<0.000000e+00> : vector<8x256xf32>
    %11 = tpu.matmul %9, %10, %cst_8 {dimension_numbers = #tpu.dot_dimension_numbers<[1], [0], [0], [1], [0, 0, 1, 1], [], []>} : vector<8x512xbf16>, vector<512x256xbf16>, vector<8x256xf32> -> vector<8x256xf32>
    %c0_9 = arith.constant 0 : index
    %c0_10 = arith.constant 0 : index
    %12 = vector.load %arg5[%c0_9, %c0_10] : memref<1x256xf32, #tpu.memory_space<vmem>>, vector<1x256xf32>
    %13 = vector.broadcast %12 : vector<1x256xf32> to vector<8x256xf32>
    %14 = arith.addf %11, %13 : vector<8x256xf32>
    %cst_11 = arith.constant 0.000000e+00 : f32
    %15 = vector.broadcast %cst_11 : f32 to vector<8x256xf32>
    %16 = arith.maximumf %14, %15 : vector<8x256xf32>
    %17 = arith.truncf %16 : vector<8x256xf32> to vector<8x256xbf16>
    %c0_12 = arith.constant 0 : index
    %c0_13 = arith.constant 0 : index
    %18 = vector.load %arg6[%c0_12, %c0_13] : memref<256x128xbf16, #tpu.memory_space<vmem>>, vector<256x128xbf16>
    %cst_14 = arith.constant dense<0.000000e+00> : vector<8x128xf32>
    %19 = tpu.matmul %17, %18, %cst_14 {dimension_numbers = #tpu.dot_dimension_numbers<[1], [0], [0], [1], [0, 0, 1, 1], [], []>} : vector<8x256xbf16>, vector<256x128xbf16>, vector<8x128xf32> -> vector<8x128xf32>
    %c0_15 = arith.constant 0 : index
    %c0_16 = arith.constant 0 : index
    %20 = vector.load %arg7[%c0_15, %c0_16] : memref<1x128xf32, #tpu.memory_space<vmem>>, vector<1x128xf32>
    %21 = vector.broadcast %20 : vector<1x128xf32> to vector<8x128xf32>
    %22 = arith.addf %19, %21 : vector<8x128xf32>
    %cst_17 = arith.constant 0.000000e+00 : f32
    %23 = vector.broadcast %cst_17 : f32 to vector<8x128xf32>
    %24 = arith.maximumf %22, %23 : vector<8x128xf32>
    %25 = arith.truncf %24 : vector<8x128xf32> to vector<8x128xbf16>
    %c0_18 = arith.constant 0 : index
    %c0_19 = arith.constant 0 : index
    %26 = vector.load %arg8[%c0_18, %c0_19] : memref<128x128xbf16, #tpu.memory_space<vmem>>, vector<128x128xbf16>
    %cst_20 = arith.constant dense<0.000000e+00> : vector<8x128xf32>
    %27 = tpu.matmul %25, %26, %cst_20 {dimension_numbers = #tpu.dot_dimension_numbers<[1], [0], [0], [1], [0, 0, 1, 1], [], []>} : vector<8x128xbf16>, vector<128x128xbf16>, vector<8x128xf32> -> vector<8x128xf32>
    %c0_21 = arith.constant 0 : index
    %c0_22 = arith.constant 0 : index
    %28 = vector.load %arg9[%c0_21, %c0_22] : memref<1x128xf32, #tpu.memory_space<vmem>>, vector<1x128xf32>
    %29 = vector.broadcast %28 : vector<1x128xf32> to vector<8x128xf32>
    %30 = arith.addf %27, %29 : vector<8x128xf32>
    %cst_23 = arith.constant 0.000000e+00 : f32
    %31 = vector.broadcast %cst_23 : f32 to vector<8x128xf32>
    %32 = arith.maximumf %30, %31 : vector<8x128xf32>
    %33 = arith.truncf %32 : vector<8x128xf32> to vector<8x128xbf16>
    %c0_24 = arith.constant 0 : index
    %c0_25 = arith.constant 0 : index
    %34 = vector.load %arg10[%c0_24, %c0_25] : memref<128x128xbf16, #tpu.memory_space<vmem>>, vector<128x128xbf16>
    %cst_26 = arith.constant dense<0.000000e+00> : vector<8x128xf32>
    %35 = tpu.matmul %33, %34, %cst_26 {dimension_numbers = #tpu.dot_dimension_numbers<[1], [0], [0], [1], [0, 0, 1, 1], [], []>} : vector<8x128xbf16>, vector<128x128xbf16>, vector<8x128xf32> -> vector<8x128xf32>
    %c0_27 = arith.constant 0 : index
    %c0_28 = arith.constant 0 : index
    %36 = vector.load %arg11[%c0_27, %c0_28] : memref<1x128xf32, #tpu.memory_space<vmem>>, vector<1x128xf32>
    %37 = vector.broadcast %36 : vector<1x128xf32> to vector<8x128xf32>
    %38 = arith.addf %35, %37 : vector<8x128xf32>
    %c0_29 = arith.constant 0 : index
    %c0_30 = arith.constant 0 : index
    %39 = vector.load %arg12[%c0_29, %c0_30] : memref<8x128xf32, #tpu.memory_space<vmem>>, vector<8x128xf32>
    tpu.vector_store %arg12[%c0_29, %c0_30], %38 {strides = array<i32>} : memref<8x128xf32, #tpu.memory_space<vmem>>, vector<8x128xf32>,
    return
  }
  func.func @transform_0(%arg0: i32) -> (i32, i32) {
    %c0_i32 = arith.constant 0 : i32
    %c0_i32_0 = arith.constant 0 : i32
    return %arg0, %c0_i32 : i32, i32
  }
  func.func @transform_1(%arg0: i32) -> (i32, i32) {
    %c0_i32 = arith.constant 0 : i32
    %c0_i32_0 = arith.constant 0 : i32
    %c0_i32_1 = arith.constant 0 : i32
    return %c0_i32, %c0_i32_0 : i32, i32
  }
  func.func @transform_2(%arg0: i32) -> (i32, i32) {
    %c0_i32 = arith.constant 0 : i32
    %c0_i32_0 = arith.constant 0 : i32
    %c0_i32_1 = arith.constant 0 : i32
    return %c0_i32, %c0_i32_0 : i32, i32
  }
  func.func @transform_3(%arg0: i32) -> (i32, i32) {
    %c0_i32 = arith.constant 0 : i32
    %c0_i32_0 = arith.constant 0 : i32
    %c0_i32_1 = arith.constant 0 : i32
    return %c0_i32, %c0_i32_0 : i32, i32
  }
  func.func @transform_4(%arg0: i32) -> (i32, i32) {
    %c0_i32 = arith.constant 0 : i32
    %c0_i32_0 = arith.constant 0 : i32
    %c0_i32_1 = arith.constant 0 : i32
    return %c0_i32, %c0_i32_0 : i32, i32
  }
  func.func @transform_5(%arg0: i32) -> (i32, i32) {
    %c0_i32 = arith.constant 0 : i32
    %c0_i32_0 = arith.constant 0 : i32
    %c0_i32_1 = arith.constant 0 : i32
    return %c0_i32, %c0_i32_0 : i32, i32
  }
  func.func @transform_6(%arg0: i32) -> (i32, i32) {
    %c0_i32 = arith.constant 0 : i32
    %c0_i32_0 = arith.constant 0 : i32
    %c0_i32_1 = arith.constant 0 : i32
    return %c0_i32, %c0_i32_0 : i32, i32
  }
  func.func @transform_7(%arg0: i32) -> (i32, i32) {
    %c0_i32 = arith.constant 0 : i32
    %c0_i32_0 = arith.constant 0 : i32
    %c0_i32_1 = arith.constant 0 : i32
    return %c0_i32, %c0_i32_0 : i32, i32
  }
  func.func @transform_8(%arg0: i32) -> (i32, i32) {
    %c0_i32 = arith.constant 0 : i32
    %c0_i32_0 = arith.constant 0 : i32
    %c0_i32_1 = arith.constant 0 : i32
    return %c0_i32, %c0_i32_0 : i32, i32
  }
  func.func @transform_9(%arg0: i32) -> (i32, i32) {
    %c0_i32 = arith.constant 0 : i32
    %c0_i32_0 = arith.constant 0 : i32
    %c0_i32_1 = arith.constant 0 : i32
    return %c0_i32, %c0_i32_0 : i32, i32
  }
  func.func @transform_10(%arg0: i32) -> (i32, i32) {
    %c0_i32 = arith.constant 0 : i32
    %c0_i32_0 = arith.constant 0 : i32
    %c0_i32_1 = arith.constant 0 : i32
    return %c0_i32, %c0_i32_0 : i32, i32
  }
  func.func @transform_11(%arg0: i32) -> (i32, i32) {
    %c0_i32 = arith.constant 0 : i32
    %c0_i32_0 = arith.constant 0 : i32
    return %arg0, %c0_i32 : i32, i32
  }
}

</mosaic_0001>

<llo_original>
// kernel: tpu_custom_call.1
$region0: #{tpu_custom_call.1}
  #allocation0 [shape = 'u32[]', space=smem, size = 0x4, offset = 0x4, fixed_abs, tag = 'smem constant byte address 0x4 - core index']
  #allocation1 [shape = 'u32[144,128]{1,0:T(1,128)}', space=vmem, size = 0x12000, scoped, tag = 'internal scratch']
  %s0 = inlined_call_operand.hbm [shape: f32[8,784], index: 0, kind: input, shape index: {}]
  %s1 = inlined_call_operand.hbm [shape: bf16[784,512], index: 1, kind: input, shape index: {}]
  %s2 = inlined_call_operand.hbm [shape: f32[1,512], index: 2, kind: input, shape index: {}]
  %s3 = inlined_call_operand.hbm [shape: bf16[512,256], index: 3, kind: input, shape index: {}]
  %s4 = inlined_call_operand.vmem [shape: f32[1,256], index: 4, kind: input, shape index: {}]
  %s5 = inlined_call_operand.hbm [shape: bf16[256,128], index: 5, kind: input, shape index: {}]
  %s6 = inlined_call_operand.vmem [shape: f32[1,128], index: 6, kind: input, shape index: {}]
  %s7 = inlined_call_operand.hbm [shape: bf16[128,128], index: 7, kind: input, shape index: {}]
  %s8 = inlined_call_operand.vmem [shape: f32[1,128], index: 8, kind: input, shape index: {}]
  %s9 = inlined_call_operand.hbm [shape: bf16[128,128], index: 9, kind: input, shape index: {}]
  %s10 = inlined_call_operand.vmem [shape: f32[1,128], index: 10, kind: input, shape index: {}]
  %s11 = inlined_call_operand.hbm [shape: f32[8,128], index: 11, kind: output, shape index: {}]
  %s12 = sld [smem:[#allocation0]]
  $region82: #{tpu_custom_call.1} parent=0
    _
  %s14 = ssub.s32 1, %s12
  %s15 = scalar_select 0, %s14, %s12
  $region1: #{tpu_custom_call.1} parent=0
    #allocation2 [shape = 'u8[28672]{0}', space=vmem, size = 0x7000, scoped, tag = 'input window, operand 0, single buffered']
    #allocation3 [shape = 's32[1]{0}', space=sflag, size = 0x4, scoped, tag = 'scoped memory for tpu_custom_call.1']
    #allocation4 [shape = 's32[1]{0}', space=sflag, size = 0x4, scoped, tag = 'scoped memory for tpu_custom_call.1']
    #allocation5 [shape = 'u8[802816]{0}', space=vmem, size = 0xc4000, scoped, tag = 'input window, operand 1, single buffered']
    #allocation6 [shape = 's32[1]{0}', space=sflag, size = 0x4, scoped, tag = 'scoped memory for tpu_custom_call.1']
    #allocation7 [shape = 'u8[2048]{0}', space=vmem, size = 0x800, scoped, tag = 'input window, operand 2, single buffered']
    #allocation8 [shape = 'u8[262144]{0}', space=vmem, size = 0x40000, scoped, tag = 'input window, operand 3, single buffered']
    #allocation9 [shape = 's32[1]{0}', space=sflag, size = 0x4, scoped, tag = 'scoped memory for tpu_custom_call.1']
    #allocation10 [shape = 'u8[65536]{0}', space=vmem, size = 0x10000, scoped, tag = 'input window, operand 5, single buffered']
    #allocation11 [shape = 'u8[32768]{0}', space=vmem, size = 0x8000, scoped, tag = 'input window, operand 7, single buffered']
    #allocation12 [shape = 's32[1]{0}', space=sflag, size = 0x4, scoped, tag = 'scoped memory for tpu_custom_call.1']
    #allocation13 [shape = 'u8[32768]{0}', space=vmem, size = 0x8000, scoped, tag = 'input window, operand 9, single buffered']
    #allocation14 [shape = 'u8[4096]{0}', space=vmem, size = 0x1000, scoped, tag = 'output window, operand 0, single buffered']
    %16 = vsyncpa [#allocation3], 0
    %17 = vsyncpa [#allocation6], 0
    %18 = vsyncpa [#allocation9], 0
    %19 = vsyncpa [#allocation12], 0
    %20 = vsyncpa [#allocation4], 0
    // Predicated region
    $region2: #{tpu_custom_call.1} parent=1 // pred_check
      _
    $region3: #{tpu_custom_call.1} parent=1 // pred_check_branch
      %22 = sbr.rel (0) target = $region5
    $region4: #{tpu_custom_call.1} parent=1 // pred_region
      %s24 = ssub.s32 896, 896
      %25 = vsyncadd [#allocation3], %s24
      %s27 = sshll.u32 [#allocation2], 4
      %s28 = int_to_ptr.vmem [resolvable:$true] %s27
      %30 = dma.hbm_to_vmem [thread:$0]  %s0, 896, %s28, [#allocation3]
    $region5: #{tpu_custom_call.1} parent=1 // pred_fallthru
      _
    // Predicated region
    $region6: #{tpu_custom_call.1} parent=1 // pred_check
      _
    $region7: #{tpu_custom_call.1} parent=1 // pred_check_branch
      %32 = sbr.rel (0) target = $region9
    $region8: #{tpu_custom_call.1} parent=1 // pred_region
      %s34 = ssub.s32 25088, 25088
      %35 = vsyncadd [#allocation6], %s34
      %s36 = sshll.u32 [#allocation5], 4
      %s37 = int_to_ptr.vmem [resolvable:$true] %s36
      %42 = dma.hbm_to_vmem [thread:$0]  %s1, 25088, %s37, [#allocation6], 256, 256, 16
    $region9: #{tpu_custom_call.1} parent=1 // pred_fallthru
      _
    // Predicated region
    $region10: #{tpu_custom_call.1} parent=1 // pred_check
      _
    $region11: #{tpu_custom_call.1} parent=1 // pred_check_branch
      %44 = sbr.rel (0) target = $region13
    $region12: #{tpu_custom_call.1} parent=1 // pred_region
      %s46 = ssub.s32 64, 64
      %47 = vsyncadd [#allocation6], %s46
      %s49 = sshll.u32 [#allocation7], 4
      %s50 = int_to_ptr.vmem [resolvable:$true] %s49
      %52 = dma.hbm_to_vmem [thread:$0]  %s2, 64, %s50, [#allocation6]
    $region13: #{tpu_custom_call.1} parent=1 // pred_fallthru
      _
    // Predicated region
    $region14: #{tpu_custom_call.1} parent=1 // pred_check
      _
    $region15: #{tpu_custom_call.1} parent=1 // pred_check_branch
      %54 = sbr.rel (0) target = $region17
    $region16: #{tpu_custom_call.1} parent=1 // pred_region
      %s56 = ssub.s32 8192, 8192
      %57 = vsyncadd [#allocation9], %s56
      %s58 = sshll.u32 [#allocation8], 4
      %s59 = int_to_ptr.vmem [resolvable:$true] %s58
      %64 = dma.hbm_to_vmem [thread:$0]  %s3, 8192, %s59, [#allocation9], 128, 128, 8
    $region17: #{tpu_custom_call.1} parent=1 // pred_fallthru
      _
    // Predicated region
    $region18: #{tpu_custom_call.1} parent=1 // pred_check
      _
    $region19: #{tpu_custom_call.1} parent=1 // pred_check_branch
      %66 = sbr.rel (0) target = $region21
    $region20: #{tpu_custom_call.1} parent=1 // pred_region
      _
    $region21: #{tpu_custom_call.1} parent=1 // pred_fallthru
      _
    // Predicated region
    $region22: #{tpu_custom_call.1} parent=1 // pred_check
      _
    $region23: #{tpu_custom_call.1} parent=1 // pred_check_branch
      %68 = sbr.rel (0) target = $region25
    $region24: #{tpu_custom_call.1} parent=1 // pred_region
      %s70 = ssub.s32 2048, 2048
      %71 = vsyncadd [#allocation9], %s70
      %s72 = sshll.u32 [#allocation10], 4
      %s73 = int_to_ptr.vmem [resolvable:$true] %s72
      %78 = dma.hbm_to_vmem [thread:$0]  %s5, 2048, %s73, [#allocation9], 64, 64, 4
    $region25: #{tpu_custom_call.1} parent=1 // pred_fallthru
      _
    // Predicated region
    $region26: #{tpu_custom_call.1} parent=1 // pred_check
      _
    $region27: #{tpu_custom_call.1} parent=1 // pred_check_branch
      %80 = sbr.rel (0) target = $region29
    $region28: #{tpu_custom_call.1} parent=1 // pred_region
      _
    $region29: #{tpu_custom_call.1} parent=1 // pred_fallthru
      _
    // Predicated region
    $region30: #{tpu_custom_call.1} parent=1 // pred_check
      _
    $region31: #{tpu_custom_call.1} parent=1 // pred_check_branch
      %82 = sbr.rel (0) target = $region33
    $region32: #{tpu_custom_call.1} parent=1 // pred_region
      %s84 = ssub.s32 1024, 1024
      %85 = vsyncadd [#allocation12], %s84
      %s86 = sshll.u32 [#allocation11], 4
      %s87 = int_to_ptr.vmem [resolvable:$true] %s86
      %92 = dma.hbm_to_vmem [thread:$0]  %s7, 1024, %s87, [#allocation12], 64, 64, 4
    $region33: #{tpu_custom_call.1} parent=1 // pred_fallthru
      _
    // Predicated region
    $region34: #{tpu_custom_call.1} parent=1 // pred_check
      _
    $region35: #{tpu_custom_call.1} parent=1 // pred_check_branch
      %94 = sbr.rel (0) target = $region37
    $region36: #{tpu_custom_call.1} parent=1 // pred_region
      _
    $region37: #{tpu_custom_call.1} parent=1 // pred_fallthru
      _
    // Predicated region
    $region38: #{tpu_custom_call.1} parent=1 // pred_check
      _
    $region39: #{tpu_custom_call.1} parent=1 // pred_check_branch
      %96 = sbr.rel (0) target = $region41
    $region40: #{tpu_custom_call.1} parent=1 // pred_region
      %s98 = ssub.s32 1024, 1024
      %99 = vsyncadd [#allocation12], %s98
      %s100 = sshll.u32 [#allocation13], 4
      %s101 = int_to_ptr.vmem [resolvable:$true] %s100
      %106 = dma.hbm_to_vmem [thread:$0]  %s9, 1024, %s101, [#allocation12], 64, 64, 4
    $region41: #{tpu_custom_call.1} parent=1 // pred_fallthru
      _
    // Predicated region
    $region42: #{tpu_custom_call.1} parent=1 // pred_check
      _
    $region43: #{tpu_custom_call.1} parent=1 // pred_check_branch
      %108 = sbr.rel (0) target = $region45
    $region44: #{tpu_custom_call.1} parent=1 // pred_region
      _
    $region45: #{tpu_custom_call.1} parent=1 // pred_fallthru
      _
    // Predicated region
    $region46: #{tpu_custom_call.1} parent=1 // pred_check
      _
    $region47: #{tpu_custom_call.1} parent=1 // pred_check_branch
      %110 = sbr.rel (0) target = $region49
    $region48: #{tpu_custom_call.1} parent=1 // pred_region
      %111 = dma.done [#allocation3], 896
    $region49: #{tpu_custom_call.1} parent=1 // pred_fallthru
      _
    // Predicated region
    $region50: #{tpu_custom_call.1} parent=1 // pred_check
      _
    $region51: #{tpu_custom_call.1} parent=1 // pred_check_branch
      %113 = sbr.rel (0) target = $region53
    $region52: #{tpu_custom_call.1} parent=1 // pred_region
      %114 = dma.done [#allocation6], 25088
    $region53: #{tpu_custom_call.1} parent=1 // pred_fallthru
      _
    // Predicated region
    $region54: #{tpu_custom_call.1} parent=1 // pred_check
      _
    $region55: #{tpu_custom_call.1} parent=1 // pred_check_branch
      %116 = sbr.rel (0) target = $region57
    $region56: #{tpu_custom_call.1} parent=1 // pred_region
      %117 = dma.done [#allocation6], 64
    $region57: #{tpu_custom_call.1} parent=1 // pred_fallthru
      _
    // Predicated region
    $region58: #{tpu_custom_call.1} parent=1 // pred_check
      _
    $region59: #{tpu_custom_call.1} parent=1 // pred_check_branch
      %119 = sbr.rel (0) target = $region61
    $region60: #{tpu_custom_call.1} parent=1 // pred_region
      %120 = dma.done [#allocation9], 8192
    $region61: #{tpu_custom_call.1} parent=1 // pred_fallthru
      _
    // Predicated region
    $region62: #{tpu_custom_call.1} parent=1 // pred_check
      _
    $region63: #{tpu_custom_call.1} parent=1 // pred_check_branch
      %122 = sbr.rel (0) target = $region65
    $region64: #{tpu_custom_call.1} parent=1 // pred_region
      %123 = dma.done [#allocation9], 2048
    $region65: #{tpu_custom_call.1} parent=1 // pred_fallthru
      _
    // Predicated region
    $region66: #{tpu_custom_call.1} parent=1 // pred_check
      _
    $region67: #{tpu_custom_call.1} parent=1 // pred_check_branch
      %125 = sbr.rel (0) target = $region69
    $region68: #{tpu_custom_call.1} parent=1 // pred_region
      %126 = dma.done [#allocation12], 1024
    $region69: #{tpu_custom_call.1} parent=1 // pred_fallthru
      _
    // Predicated region
    $region70: #{tpu_custom_call.1} parent=1 // pred_check
      _
    $region71: #{tpu_custom_call.1} parent=1 // pred_check_branch
      %128 = sbr.rel (0) target = $region73
    $region72: #{tpu_custom_call.1} parent=1 // pred_region
      %129 = dma.done [#allocation12], 1024
    $region73: #{tpu_custom_call.1} parent=1 // pred_fallthru
      _
    %v131 = vld [vmem:[#allocation2] sm:$0xff]
    %v132 = vld [vmem:[#allocation2 + $0x8] sm:$0xff]
    %v133 = vld [vmem:[#allocation2 + $0x10] sm:$0xff]
    %v134 = vld [vmem:[#allocation2 + $0x18] sm:$0xff]
    %v135 = vld [vmem:[#allocation2 + $0x20] sm:$0xff]
    %v136 = vld [vmem:[#allocation2 + $0x28] sm:$0xff]
    %v137 = vld [vmem:[#allocation2 + $0x30] sm:$0xff]
    %v138 = vpack.c.bf16 %v131, %v131
    %v139 = vpack.c.bf16 %v132, %v132
    %v140 = vpack.c.bf16 %v133, %v133
    %v141 = vpack.c.bf16 %v134, %v134
    %v142 = vpack.c.bf16 %v135, %v135
    %v143 = vpack.c.bf16 %v136, %v136
    %v144 = vpack.c.bf16 %v137, %v137
    %v145 = vld [vmem:[#allocation5] sm:$0xff]
    %v146 = vld [vmem:[#allocation5 + $0x8] sm:$0xff]
    %v147 = vld [vmem:[#allocation5 + $0x10] sm:$0xff]
    %v148 = vld [vmem:[#allocation5 + $0x18] sm:$0xff]
    %v149 = vld [vmem:[#allocation5 + $0x20] sm:$0xff]
    %v150 = vld [vmem:[#allocation5 + $0x28] sm:$0xff]
    %v151 = vld [vmem:[#allocation5 + $0x30] sm:$0xff]
    %v152 = vld [vmem:[#allocation5 + $0x38] sm:$0xff]
    %v153 = vld [vmem:[#allocation5 + $0x40] sm:$0xff]
    %v154 = vld [vmem:[#allocation5 + $0x48] sm:$0xff]
    %v155 = vld [vmem:[#allocation5 + $0x50] sm:$0xff]
    %v156 = vld [vmem:[#allocation5 + $0x58] sm:$0xff]
    %v157 = vld [vmem:[#allocation5 + $0x60] sm:$0xff]
    %v158 = vld [vmem:[#allocation5 + $0x68] sm:$0xff]
    %v159 = vld [vmem:[#allocation5 + $0x70] sm:$0xff]
    %v160 = vld [vmem:[#allocation5 + $0x78] sm:$0xff]
    %v161 = vld [vmem:[#allocation5 + $0x80] sm:$0xff]
    %v162 = vld [vmem:[#allocation5 + $0x88] sm:$0xff]
    %v163 = vld [vmem:[#allocation5 + $0x90] sm:$0xff]
    %v164 = vld [vmem:[#allocation5 + $0x98] sm:$0xff]
    %v165 = vld [vmem:[#allocation5 + $0xa0] sm:$0xff]
    %v166 = vld [vmem:[#allocation5 + $0xa8] sm:$0xff]
    %v167 = vld [vmem:[#allocation5 + $0xb0] sm:$0xff]
    %v168 = vld [vmem:[#allocation5 + $0xb8] sm:$0xff]
    %v169 = vld [vmem:[#allocation5 + $0xc0] sm:$0xff]
    %v170 = vld [vmem:[#allocation5 + $0xc8] sm:$0xff]
    %v171 = vld [vmem:[#allocation5 + $0xd0] sm:$0xff]
    %v172 = vld [vmem:[#allocation5 + $0xd8] sm:$0xff]
    %v173 = vld [vmem:[#allocation5 + $0xe0] sm:$0xff]
    %v174 = vld [vmem:[#allocation5 + $0xe8] sm:$0xff]
    %v175 = vld [vmem:[#allocation5 + $0xf0] sm:$0xff]
    %v176 = vld [vmem:[#allocation5 + $0xf8] sm:$0xff]
    %v177 = vld [vmem:[#allocation5 + $0x100] sm:$0xff]
    %v178 = vld [vmem:[#allocation5 + $0x108] sm:$0xff]
    %v179 = vld [vmem:[#allocation5 + $0x110] sm:$0xff]
    %v180 = vld [vmem:[#allocation5 + $0x118] sm:$0xff]
    %v181 = vld [vmem:[#allocation5 + $0x120] sm:$0xff]
    %v182 = vld [vmem:[#allocation5 + $0x128] sm:$0xff]
    %v183 = vld [vmem:[#allocation5 + $0x130] sm:$0xff]
    %v184 = vld [vmem:[#allocation5 + $0x138] sm:$0xff]
    %v185 = vld [vmem:[#allocation5 + $0x140] sm:$0xff]
    %v186 = vld [vmem:[#allocation5 + $0x148] sm:$0xff]
    %v187 = vld [vmem:[#allocation5 + $0x150] sm:$0xff]
    %v188 = vld [vmem:[#allocation5 + $0x158] sm:$0xff]
    %v189 = vld [vmem:[#allocation5 + $0x160] sm:$0xff]
    %v190 = vld [vmem:[#allocation5 + $0x168] sm:$0xff]
    %v191 = vld [vmem:[#allocation5 + $0x170] sm:$0xff]
    %v192 = vld [vmem:[#allocation5 + $0x178] sm:$0xff]
    %v193 = vld [vmem:[#allocation5 + $0x180] sm:$0xff]
    %v194 = vld [vmem:[#allocation5 + $0x188] sm:$0xff]
    %v195 = vld [vmem:[#allocation5 + $0x190] sm:$0xff]
    %v196 = vld [vmem:[#allocation5 + $0x198] sm:$0xff]
    %v197 = vld [vmem:[#allocation5 + $0x1a0] sm:$0xff]
    %v198 = vld [vmem:[#allocation5 + $0x1a8] sm:$0xff]
    %v199 = vld [vmem:[#allocation5 + $0x1b0] sm:$0xff]
    %v200 = vld [vmem:[#allocation5 + $0x1b8] sm:$0xff]
    %v201 = vld [vmem:[#allocation5 + $0x1c0] sm:$0xff]
    %v202 = vld [vmem:[#allocation5 + $0x1c8] sm:$0xff]
    %v203 = vld [vmem:[#allocation5 + $0x1d0] sm:$0xff]
    %v204 = vld [vmem:[#allocation5 + $0x1d8] sm:$0xff]
    %v205 = vld [vmem:[#allocation5 + $0x1e0] sm:$0xff]
    %v206 = vld [vmem:[#allocation5 + $0x1e8] sm:$0xff]
    %v207 = vld [vmem:[#allocation5 + $0x1f0] sm:$0xff]
    %v208 = vld [vmem:[#allocation5 + $0x1f8] sm:$0xff]
    %v209 = vld [vmem:[#allocation5 + $0x200] sm:$0xff]
    %v210 = vld [vmem:[#allocation5 + $0x208] sm:$0xff]
    %v211 = vld [vmem:[#allocation5 + $0x210] sm:$0xff]
    %v212 = vld [vmem:[#allocation5 + $0x218] sm:$0xff]
    %v213 = vld [vmem:[#allocation5 + $0x220] sm:$0xff]
    %v214 = vld [vmem:[#allocation5 + $0x228] sm:$0xff]
    %v215 = vld [vmem:[#allocation5 + $0x230] sm:$0xff]
    %v216 = vld [vmem:[#allocation5 + $0x238] sm:$0xff]
    %v217 = vld [vmem:[#allocation5 + $0x240] sm:$0xff]
    %v218 = vld [vmem:[#allocation5 + $0x248] sm:$0xff]
    %v219 = vld [vmem:[#allocation5 + $0x250] sm:$0xff]
    %v220 = vld [vmem:[#allocation5 + $0x258] sm:$0xff]
    %v221 = vld [vmem:[#allocation5 + $0x260] sm:$0xff]
    %v222 = vld [vmem:[#allocation5 + $0x268] sm:$0xff]
    %v223 = vld [vmem:[#allocation5 + $0x270] sm:$0xff]
    %v224 = vld [vmem:[#allocation5 + $0x278] sm:$0xff]
    %v225 = vld [vmem:[#allocation5 + $0x280] sm:$0xff]
    %v226 = vld [vmem:[#allocation5 + $0x288] sm:$0xff]
    %v227 = vld [vmem:[#allocation5 + $0x290] sm:$0xff]
    %v228 = vld [vmem:[#allocation5 + $0x298] sm:$0xff]
    %v229 = vld [vmem:[#allocation5 + $0x2a0] sm:$0xff]
    %v230 = vld [vmem:[#allocation5 + $0x2a8] sm:$0xff]
    %v231 = vld [vmem:[#allocation5 + $0x2b0] sm:$0xff]
    %v232 = vld [vmem:[#allocation5 + $0x2b8] sm:$0xff]
    %v233 = vld [vmem:[#allocation5 + $0x2c0] sm:$0xff]
    %v234 = vld [vmem:[#allocation5 + $0x2c8] sm:$0xff]
    %v235 = vld [vmem:[#allocation5 + $0x2d0] sm:$0xff]
    %v236 = vld [vmem:[#allocation5 + $0x2d8] sm:$0xff]
    %v237 = vld [vmem:[#allocation5 + $0x2e0] sm:$0xff]
    %v238 = vld [vmem:[#allocation5 + $0x2e8] sm:$0xff]
    %v239 = vld [vmem:[#allocation5 + $0x2f0] sm:$0xff]
    %v240 = vld [vmem:[#allocation5 + $0x2f8] sm:$0xff]
    %v241 = vld [vmem:[#allocation5 + $0x300] sm:$0xff]
    %v242 = vld [vmem:[#allocation5 + $0x308] sm:$0xff]
    %v243 = vld [vmem:[#allocation5 + $0x310] sm:$0xff]
    %v244 = vld [vmem:[#allocation5 + $0x318] sm:$0xff]
    %v245 = vld [vmem:[#allocation5 + $0x320] sm:$0xff]
    %v246 = vld [vmem:[#allocation5 + $0x328] sm:$0xff]
    %v247 = vld [vmem:[#allocation5 + $0x330] sm:$0xff]
    %v248 = vld [vmem:[#allocation5 + $0x338] sm:$0xff]
    %v249 = vld [vmem:[#allocation5 + $0x340] sm:$0xff]
    %v250 = vld [vmem:[#allocation5 + $0x348] sm:$0xff]
    %v251 = vld [vmem:[#allocation5 + $0x350] sm:$0xff]
    %v252 = vld [vmem:[#allocation5 + $0x358] sm:$0xff]
    %v253 = vld [vmem:[#allocation5 + $0x360] sm:$0xff]
    %v254 = vld [vmem:[#allocation5 + $0x368] sm:$0xff]
    %v255 = vld [vmem:[#allocation5 + $0x370] sm:$0xff]
    %v256 = vld [vmem:[#allocation5 + $0x378] sm:$0xff]
    %v257 = vld [vmem:[#allocation5 + $0x380] sm:$0xff]
    %v258 = vld [vmem:[#allocation5 + $0x388] sm:$0xff]
    %v259 = vld [vmem:[#allocation5 + $0x390] sm:$0xff]
    %v260 = vld [vmem:[#allocation5 + $0x398] sm:$0xff]
    %v261 = vld [vmem:[#allocation5 + $0x3a0] sm:$0xff]
    %v262 = vld [vmem:[#allocation5 + $0x3a8] sm:$0xff]
    %v263 = vld [vmem:[#allocation5 + $0x3b0] sm:$0xff]
    %v264 = vld [vmem:[#allocation5 + $0x3b8] sm:$0xff]
    %v265 = vld [vmem:[#allocation5 + $0x3c0] sm:$0xff]
    %v266 = vld [vmem:[#allocation5 + $0x3c8] sm:$0xff]
    %v267 = vld [vmem:[#allocation5 + $0x3d0] sm:$0xff]
    %v268 = vld [vmem:[#allocation5 + $0x3d8] sm:$0xff]
    %v269 = vld [vmem:[#allocation5 + $0x3e0] sm:$0xff]
    %v270 = vld [vmem:[#allocation5 + $0x3e8] sm:$0xff]
    %v271 = vld [vmem:[#allocation5 + $0x3f0] sm:$0xff]
    %v272 = vld [vmem:[#allocation5 + $0x3f8] sm:$0xff]
    %v273 = vld [vmem:[#allocation5 + $0x400] sm:$0xff]
    %v274 = vld [vmem:[#allocation5 + $0x408] sm:$0xff]
    %v275 = vld [vmem:[#allocation5 + $0x410] sm:$0xff]
    %v276 = vld [vmem:[#allocation5 + $0x418] sm:$0xff]
    %v277 = vld [vmem:[#allocation5 + $0x420] sm:$0xff]
    %v278 = vld [vmem:[#allocation5 + $0x428] sm:$0xff]
    %v279 = vld [vmem:[#allocation5 + $0x430] sm:$0xff]
    %v280 = vld [vmem:[#allocation5 + $0x438] sm:$0xff]
    %v281 = vld [vmem:[#allocation5 + $0x440] sm:$0xff]
    %v282 = vld [vmem:[#allocation5 + $0x448] sm:$0xff]
    %v283 = vld [vmem:[#allocation5 + $0x450] sm:$0xff]
    %v284 = vld [vmem:[#allocation5 + $0x458] sm:$0xff]
    %v285 = vld [vmem:[#allocation5 + $0x460] sm:$0xff]
    %v286 = vld [vmem:[#allocation5 + $0x468] sm:$0xff]
    %v287 = vld [vmem:[#allocation5 + $0x470] sm:$0xff]
    %v288 = vld [vmem:[#allocation5 + $0x478] sm:$0xff]
    %v289 = vld [vmem:[#allocation5 + $0x480] sm:$0xff]
    %v290 = vld [vmem:[#allocation5 + $0x488] sm:$0xff]
    %v291 = vld [vmem:[#allocation5 + $0x490] sm:$0xff]
    %v292 = vld [vmem:[#allocation5 + $0x498] sm:$0xff]
    %v293 = vld [vmem:[#allocation5 + $0x4a0] sm:$0xff]
    %v294 = vld [vmem:[#allocation5 + $0x4a8] sm:$0xff]
    %v295 = vld [vmem:[#allocation5 + $0x4b0] sm:$0xff]
    %v296 = vld [vmem:[#allocation5 + $0x4b8] sm:$0xff]
    %v297 = vld [vmem:[#allocation5 + $0x4c0] sm:$0xff]
    %v298 = vld [vmem:[#allocation5 + $0x4c8] sm:$0xff]
    %v299 = vld [vmem:[#allocation5 + $0x4d0] sm:$0xff]
    %v300 = vld [vmem:[#allocation5 + $0x4d8] sm:$0xff]
    %v301 = vld [vmem:[#allocation5 + $0x4e0] sm:$0xff]
    %v302 = vld [vmem:[#allocation5 + $0x4e8] sm:$0xff]
    %v303 = vld [vmem:[#allocation5 + $0x4f0] sm:$0xff]
    %v304 = vld [vmem:[#allocation5 + $0x4f8] sm:$0xff]
    %v305 = vld [vmem:[#allocation5 + $0x500] sm:$0xff]
    %v306 = vld [vmem:[#allocation5 + $0x508] sm:$0xff]
    %v307 = vld [vmem:[#allocation5 + $0x510] sm:$0xff]
    %v308 = vld [vmem:[#allocation5 + $0x518] sm:$0xff]
    %v309 = vld [vmem:[#allocation5 + $0x520] sm:$0xff]
    %v310 = vld [vmem:[#allocation5 + $0x528] sm:$0xff]
    %v311 = vld [vmem:[#allocation5 + $0x530] sm:$0xff]
    %v312 = vld [vmem:[#allocation5 + $0x538] sm:$0xff]
    %v313 = vld [vmem:[#allocation5 + $0x540] sm:$0xff]
    %v314 = vld [vmem:[#allocation5 + $0x548] sm:$0xff]
    %v315 = vld [vmem:[#allocation5 + $0x550] sm:$0xff]
    %v316 = vld [vmem:[#allocation5 + $0x558] sm:$0xff]
    %v317 = vld [vmem:[#allocation5 + $0x560] sm:$0xff]
    %v318 = vld [vmem:[#allocation5 + $0x568] sm:$0xff]
    %v319 = vld [vmem:[#allocation5 + $0x570] sm:$0xff]
    %v320 = vld [vmem:[#allocation5 + $0x578] sm:$0xff]
    %v321 = vld [vmem:[#allocation5 + $0x580] sm:$0xff]
    %v322 = vld [vmem:[#allocation5 + $0x588] sm:$0xff]
    %v323 = vld [vmem:[#allocation5 + $0x590] sm:$0xff]
    %v324 = vld [vmem:[#allocation5 + $0x598] sm:$0xff]
    %v325 = vld [vmem:[#allocation5 + $0x5a0] sm:$0xff]
    %v326 = vld [vmem:[#allocation5 + $0x5a8] sm:$0xff]
    %v327 = vld [vmem:[#allocation5 + $0x5b0] sm:$0xff]
    %v328 = vld [vmem:[#allocation5 + $0x5b8] sm:$0xff]
    %v329 = vld [vmem:[#allocation5 + $0x5c0] sm:$0xff]
    %v330 = vld [vmem:[#allocation5 + $0x5c8] sm:$0xff]
    %v331 = vld [vmem:[#allocation5 + $0x5d0] sm:$0xff]
    %v332 = vld [vmem:[#allocation5 + $0x5d8] sm:$0xff]
    %v333 = vld [vmem:[#allocation5 + $0x5e0] sm:$0xff]
    %v334 = vld [vmem:[#allocation5 + $0x5e8] sm:$0xff]
    %v335 = vld [vmem:[#allocation5 + $0x5f0] sm:$0xff]
    %v336 = vld [vmem:[#allocation5 + $0x5f8] sm:$0xff]
    %v337 = vld [vmem:[#allocation5 + $0x600] sm:$0xff]
    %v338 = vld [vmem:[#allocation5 + $0x608] sm:$0xff]
    %v339 = vld [vmem:[#allocation5 + $0x610] sm:$0xff]
    %v340 = vld [vmem:[#allocation5 + $0x618] sm:$0xff]
    %v341 = vld [vmem:[#allocation7] sm:$0xf]
    %v343 = vlaneseq
    %v344 = vshrl.u32 %v343, 7
    %v345 = vsub.s32 0, %v344
    %v346 = vrot.slane %v341, %v345
    %v347 = vlaneseq
    %v348 = vshrl.u32 %v347, 7
    %v349 = vsub.s32 1, %v348
    %v350 = vrot.slane %v341, %v349
    %v351 = vlaneseq
    %v352 = vshrl.u32 %v351, 7
    %v353 = vsub.s32 2, %v352
    %v354 = vrot.slane %v341, %v353
    %v355 = vlaneseq
    %v356 = vshrl.u32 %v355, 7
    %v357 = vsub.s32 3, %v356
    %v358 = vrot.slane %v341, %v357
    %v559 = vunpack.c.l.b16 %v145
    %v560 = vunpack.c.h.b16 %v145
    %v561 = vunpack.c.l.b16 %v146
    %v562 = vunpack.c.h.b16 %v146
    %v563 = vunpack.c.l.b16 %v147
    %v564 = vunpack.c.h.b16 %v147
    %v565 = vunpack.c.l.b16 %v148
    %v566 = vunpack.c.h.b16 %v148
    %v567 = vunpack.c.l.b16 %v149
    %v568 = vunpack.c.h.b16 %v149
    %v569 = vunpack.c.l.b16 %v150
    %v570 = vunpack.c.h.b16 %v150
    %v571 = vunpack.c.l.b16 %v151
    %v572 = vunpack.c.h.b16 %v151
    %v573 = vunpack.c.l.b16 %v152
    %v574 = vunpack.c.h.b16 %v152
    %v575 = vunpack.c.l.b16 %v153
    %v576 = vunpack.c.h.b16 %v153
    %v577 = vunpack.c.l.b16 %v154
    %v578 = vunpack.c.h.b16 %v154
    %v579 = vunpack.c.l.b16 %v155
    %v580 = vunpack.c.h.b16 %v155
    %v581 = vunpack.c.l.b16 %v156
    %v582 = vunpack.c.h.b16 %v156
    %v583 = vunpack.c.l.b16 %v157
    %v584 = vunpack.c.h.b16 %v157
    %v585 = vunpack.c.l.b16 %v158
    %v586 = vunpack.c.h.b16 %v158
    %v587 = vunpack.c.l.b16 %v159
    %v588 = vunpack.c.h.b16 %v159
    %v589 = vunpack.c.l.b16 %v160
    %v590 = vunpack.c.h.b16 %v160
    %v591 = vunpack.c.l.b16 %v161
    %v592 = vunpack.c.h.b16 %v161
    %v593 = vunpack.c.l.b16 %v162
    %v594 = vunpack.c.h.b16 %v162
    %v595 = vunpack.c.l.b16 %v163
    %v596 = vunpack.c.h.b16 %v163
    %v597 = vunpack.c.l.b16 %v164
    %v598 = vunpack.c.h.b16 %v164
    %v599 = vunpack.c.l.b16 %v165
    %v600 = vunpack.c.h.b16 %v165
    %v601 = vunpack.c.l.b16 %v166
    %v602 = vunpack.c.h.b16 %v166
    %v603 = vunpack.c.l.b16 %v167
    %v604 = vunpack.c.h.b16 %v167
    %v605 = vunpack.c.l.b16 %v168
    %v606 = vunpack.c.h.b16 %v168
    %v607 = vunpack.c.l.b16 %v169
    %v608 = vunpack.c.h.b16 %v169
    %v609 = vunpack.c.l.b16 %v170
    %v610 = vunpack.c.h.b16 %v170
    %v611 = vunpack.c.l.b16 %v171
    %v612 = vunpack.c.h.b16 %v171
    %v613 = vunpack.c.l.b16 %v172
    %v614 = vunpack.c.h.b16 %v172
    %v615 = vunpack.c.l.b16 %v173
    %v616 = vunpack.c.h.b16 %v173
    %v617 = vunpack.c.l.b16 %v174
    %v618 = vunpack.c.h.b16 %v174
    %v619 = vunpack.c.l.b16 %v175
    %v620 = vunpack.c.h.b16 %v175
    %v621 = vunpack.c.l.b16 %v176
    %v622 = vunpack.c.h.b16 %v176
    %v623 = vunpack.c.l.b16 %v177
    %v624 = vunpack.c.h.b16 %v177
    %v625 = vunpack.c.l.b16 %v178
    %v626 = vunpack.c.h.b16 %v178
    %v627 = vunpack.c.l.b16 %v179
    %v628 = vunpack.c.h.b16 %v179
    %v629 = vunpack.c.l.b16 %v180
    %v630 = vunpack.c.h.b16 %v180
    %v631 = vunpack.c.l.b16 %v181
    %v632 = vunpack.c.h.b16 %v181
    %v633 = vunpack.c.l.b16 %v182
    %v634 = vunpack.c.h.b16 %v182
    %v635 = vunpack.c.l.b16 %v183
    %v636 = vunpack.c.h.b16 %v183
    %v637 = vunpack.c.l.b16 %v184
    %v638 = vunpack.c.h.b16 %v184
    %v639 = vunpack.c.l.b16 %v185
    %v640 = vunpack.c.h.b16 %v185
    %v641 = vunpack.c.l.b16 %v186
    %v642 = vunpack.c.h.b16 %v186
    %v643 = vunpack.c.l.b16 %v187
    %v644 = vunpack.c.h.b16 %v187
    %v645 = vunpack.c.l.b16 %v188
    %v646 = vunpack.c.h.b16 %v188
    %v647 = vunpack.c.l.b16 %v189
    %v648 = vunpack.c.h.b16 %v189
    %v649 = vunpack.c.l.b16 %v190
    %v650 = vunpack.c.h.b16 %v190
    %v651 = vunpack.c.l.b16 %v191
    %v652 = vunpack.c.h.b16 %v191
    %v653 = vunpack.c.l.b16 %v192
    %v654 = vunpack.c.h.b16 %v192
    %v655 = vunpack.c.l.b16 %v193
    %v656 = vunpack.c.h.b16 %v193
    %v657 = vunpack.c.l.b16 %v194
    %v658 = vunpack.c.h.b16 %v194
    %v659 = vunpack.c.l.b16 %v195
    %v660 = vunpack.c.h.b16 %v195
    %v661 = vunpack.c.l.b16 %v196
    %v662 = vunpack.c.h.b16 %v196
    %v663 = vunpack.c.l.b16 %v197
    %v664 = vunpack.c.h.b16 %v197
    %v665 = vunpack.c.l.b16 %v198
    %v666 = vunpack.c.h.b16 %v198
    %v667 = vunpack.c.l.b16 %v199
    %v668 = vunpack.c.h.b16 %v199
    %v669 = vunpack.c.l.b16 %v200
    %v670 = vunpack.c.h.b16 %v200
    %v671 = vunpack.c.l.b16 %v201
    %v672 = vunpack.c.h.b16 %v201
    %v673 = vunpack.c.l.b16 %v202
    %v674 = vunpack.c.h.b16 %v202
    %v675 = vunpack.c.l.b16 %v203
    %v676 = vunpack.c.h.b16 %v203
    %v677 = vunpack.c.l.b16 %v204
    %v678 = vunpack.c.h.b16 %v204
    %v679 = vunpack.c.l.b16 %v205
    %v680 = vunpack.c.h.b16 %v205
    %v681 = vunpack.c.l.b16 %v206
    %v682 = vunpack.c.h.b16 %v206
    %v683 = vunpack.c.l.b16 %v207
    %v684 = vunpack.c.h.b16 %v207
    %v685 = vunpack.c.l.b16 %v208
    %v686 = vunpack.c.h.b16 %v208
    %v687 = vunpack.c.l.b16 %v209
    %v688 = vunpack.c.h.b16 %v209
    %v689 = vunpack.c.l.b16 %v210
    %v690 = vunpack.c.h.b16 %v210
    %v691 = vunpack.c.l.b16 %v211
    %v692 = vunpack.c.h.b16 %v211
    %v693 = vunpack.c.l.b16 %v212
    %v694 = vunpack.c.h.b16 %v212
    %v695 = vunpack.c.l.b16 %v213
    %v696 = vunpack.c.h.b16 %v213
    %v697 = vunpack.c.l.b16 %v214
    %v698 = vunpack.c.h.b16 %v214
    %v699 = vunpack.c.l.b16 %v215
    %v700 = vunpack.c.h.b16 %v215
    %v701 = vunpack.c.l.b16 %v216
    %v702 = vunpack.c.h.b16 %v216
    %v703 = vunpack.c.l.b16 %v217
    %v704 = vunpack.c.h.b16 %v217
    %v705 = vunpack.c.l.b16 %v218
    %v706 = vunpack.c.h.b16 %v218
    %v707 = vunpack.c.l.b16 %v219
    %v708 = vunpack.c.h.b16 %v219
    %v709 = vunpack.c.l.b16 %v220
    %v710 = vunpack.c.h.b16 %v220
    %v711 = vunpack.c.l.b16 %v221
    %v712 = vunpack.c.h.b16 %v221
    %v713 = vunpack.c.l.b16 %v222
    %v714 = vunpack.c.h.b16 %v222
    %v715 = vunpack.c.l.b16 %v223
    %v716 = vunpack.c.h.b16 %v223
    %v717 = vunpack.c.l.b16 %v224
    %v718 = vunpack.c.h.b16 %v224
    %v719 = vunpack.c.l.b16 %v225
    %v720 = vunpack.c.h.b16 %v225
    %v721 = vunpack.c.l.b16 %v226
    %v722 = vunpack.c.h.b16 %v226
    %v723 = vunpack.c.l.b16 %v227
    %v724 = vunpack.c.h.b16 %v227
    %v725 = vunpack.c.l.b16 %v228
    %v726 = vunpack.c.h.b16 %v228
    %v727 = vunpack.c.l.b16 %v229
    %v728 = vunpack.c.h.b16 %v229
    %v729 = vunpack.c.l.b16 %v230
    %v730 = vunpack.c.h.b16 %v230
    %v731 = vunpack.c.l.b16 %v231
    %v732 = vunpack.c.h.b16 %v231
    %v733 = vunpack.c.l.b16 %v232
    %v734 = vunpack.c.h.b16 %v232
    %v735 = vunpack.c.l.b16 %v233
    %v736 = vunpack.c.h.b16 %v233
    %v737 = vunpack.c.l.b16 %v234
    %v738 = vunpack.c.h.b16 %v234
    %v739 = vunpack.c.l.b16 %v235
    %v740 = vunpack.c.h.b16 %v235
    %v741 = vunpack.c.l.b16 %v236
    %v742 = vunpack.c.h.b16 %v236
    %v743 = vunpack.c.l.b16 %v237
    %v744 = vunpack.c.h.b16 %v237
    %v745 = vunpack.c.l.b16 %v238
    %v746 = vunpack.c.h.b16 %v238
    %v747 = vunpack.c.l.b16 %v239
    %v748 = vunpack.c.h.b16 %v239
    %v749 = vunpack.c.l.b16 %v240
    %v750 = vunpack.c.h.b16 %v240
    %v751 = vunpack.c.l.b16 %v241
    %v752 = vunpack.c.h.b16 %v241
    %v753 = vunpack.c.l.b16 %v242
    %v754 = vunpack.c.h.b16 %v242
    %v755 = vunpack.c.l.b16 %v243
    %v756 = vunpack.c.h.b16 %v243
    %v757 = vunpack.c.l.b16 %v244
    %v758 = vunpack.c.h.b16 %v244
    %v759 = vunpack.c.l.b16 %v245
    %v760 = vunpack.c.h.b16 %v245
    %v761 = vunpack.c.l.b16 %v246
    %v762 = vunpack.c.h.b16 %v246
    %v763 = vunpack.c.l.b16 %v247
    %v764 = vunpack.c.h.b16 %v247
    %v765 = vunpack.c.l.b16 %v248
    %v766 = vunpack.c.h.b16 %v248
    %v767 = vunpack.c.l.b16 %v249
    %v768 = vunpack.c.h.b16 %v249
    %v769 = vunpack.c.l.b16 %v250
    %v770 = vunpack.c.h.b16 %v250
    %v771 = vunpack.c.l.b16 %v251
    %v772 = vunpack.c.h.b16 %v251
    %v773 = vunpack.c.l.b16 %v252
    %v774 = vunpack.c.h.b16 %v252
    %v775 = vunpack.c.l.b16 %v253
    %v776 = vunpack.c.h.b16 %v253
    %v777 = vunpack.c.l.b16 %v254
    %v778 = vunpack.c.h.b16 %v254
    %v779 = vunpack.c.l.b16 %v255
    %v780 = vunpack.c.h.b16 %v255
    %v781 = vunpack.c.l.b16 %v256
    %v782 = vunpack.c.h.b16 %v256
    %v783 = vunpack.c.l.b16 %v257
    %v784 = vunpack.c.h.b16 %v257
    %v785 = vunpack.c.l.b16 %v258
    %v786 = vunpack.c.h.b16 %v258
    %v787 = vunpack.c.l.b16 %v259
    %v788 = vunpack.c.h.b16 %v259
    %v789 = vunpack.c.l.b16 %v260
    %v790 = vunpack.c.h.b16 %v260
    %v791 = vunpack.c.l.b16 %v261
    %v792 = vunpack.c.h.b16 %v261
    %v793 = vunpack.c.l.b16 %v262
    %v794 = vunpack.c.h.b16 %v262
    %v795 = vunpack.c.l.b16 %v263
    %v796 = vunpack.c.h.b16 %v263
    %v797 = vunpack.c.l.b16 %v264
    %v798 = vunpack.c.h.b16 %v264
    %v799 = vunpack.c.l.b16 %v265
    %v800 = vunpack.c.h.b16 %v265
    %v801 = vunpack.c.l.b16 %v266
    %v802 = vunpack.c.h.b16 %v266
    %v803 = vunpack.c.l.b16 %v267
    %v804 = vunpack.c.h.b16 %v267
    %v805 = vunpack.c.l.b16 %v268
    %v806 = vunpack.c.h.b16 %v268
    %v807 = vunpack.c.l.b16 %v269
    %v808 = vunpack.c.h.b16 %v269
    %v809 = vunpack.c.l.b16 %v270
    %v810 = vunpack.c.h.b16 %v270
    %v811 = vunpack.c.l.b16 %v271
    %v812 = vunpack.c.h.b16 %v271
    %v813 = vunpack.c.l.b16 %v272
    %v814 = vunpack.c.h.b16 %v272
    %v815 = vunpack.c.l.b16 %v273
    %v816 = vunpack.c.h.b16 %v273
    %v817 = vunpack.c.l.b16 %v274
    %v818 = vunpack.c.h.b16 %v274
    %v819 = vunpack.c.l.b16 %v275
    %v820 = vunpack.c.h.b16 %v275
    %v821 = vunpack.c.l.b16 %v276
    %v822 = vunpack.c.h.b16 %v276
    %v823 = vunpack.c.l.b16 %v277
    %v824 = vunpack.c.h.b16 %v277
    %v825 = vunpack.c.l.b16 %v278
    %v826 = vunpack.c.h.b16 %v278
    %v827 = vunpack.c.l.b16 %v279
    %v828 = vunpack.c.h.b16 %v279
    %v829 = vunpack.c.l.b16 %v280
    %v830 = vunpack.c.h.b16 %v280
    %v831 = vunpack.c.l.b16 %v281
    %v832 = vunpack.c.h.b16 %v281
    %v833 = vunpack.c.l.b16 %v282
    %v834 = vunpack.c.h.b16 %v282
    %v835 = vunpack.c.l.b16 %v283
    %v836 = vunpack.c.h.b16 %v283
    %v837 = vunpack.c.l.b16 %v284
    %v838 = vunpack.c.h.b16 %v284
    %v839 = vunpack.c.l.b16 %v285
    %v840 = vunpack.c.h.b16 %v285
    %v841 = vunpack.c.l.b16 %v286
    %v842 = vunpack.c.h.b16 %v286
    %v843 = vunpack.c.l.b16 %v287
    %v844 = vunpack.c.h.b16 %v287
    %v845 = vunpack.c.l.b16 %v288
    %v846 = vunpack.c.h.b16 %v288
    %v847 = vunpack.c.l.b16 %v289
    %v848 = vunpack.c.h.b16 %v289
    %v849 = vunpack.c.l.b16 %v290
    %v850 = vunpack.c.h.b16 %v290
    %v851 = vunpack.c.l.b16 %v291
    %v852 = vunpack.c.h.b16 %v291
    %v853 = vunpack.c.l.b16 %v292
    %v854 = vunpack.c.h.b16 %v292
    %v855 = vunpack.c.l.b16 %v293
    %v856 = vunpack.c.h.b16 %v293
    %v857 = vunpack.c.l.b16 %v294
    %v858 = vunpack.c.h.b16 %v294
    %v859 = vunpack.c.l.b16 %v295
    %v860 = vunpack.c.h.b16 %v295
    %v861 = vunpack.c.l.b16 %v296
    %v862 = vunpack.c.h.b16 %v296
    %v863 = vunpack.c.l.b16 %v297
    %v864 = vunpack.c.h.b16 %v297
    %v865 = vunpack.c.l.b16 %v298
    %v866 = vunpack.c.h.b16 %v298
    %v867 = vunpack.c.l.b16 %v299
    %v868 = vunpack.c.h.b16 %v299
    %v869 = vunpack.c.l.b16 %v300
    %v870 = vunpack.c.h.b16 %v300
    %v871 = vunpack.c.l.b16 %v301
    %v872 = vunpack.c.h.b16 %v301
    %v873 = vunpack.c.l.b16 %v302
    %v874 = vunpack.c.h.b16 %v302
    %v875 = vunpack.c.l.b16 %v303
    %v876 = vunpack.c.h.b16 %v303
    %v877 = vunpack.c.l.b16 %v304
    %v878 = vunpack.c.h.b16 %v304
    %v879 = vunpack.c.l.b16 %v305
    %v880 = vunpack.c.h.b16 %v305
    %v881 = vunpack.c.l.b16 %v306
    %v882 = vunpack.c.h.b16 %v306
    %v883 = vunpack.c.l.b16 %v307
    %v884 = vunpack.c.h.b16 %v307
    %v885 = vunpack.c.l.b16 %v308
    %v886 = vunpack.c.h.b16 %v308
    %v887 = vunpack.c.l.b16 %v309
    %v888 = vunpack.c.h.b16 %v309
    %v889 = vunpack.c.l.b16 %v310
    %v890 = vunpack.c.h.b16 %v310
    %v891 = vunpack.c.l.b16 %v311
    %v892 = vunpack.c.h.b16 %v311
    %v893 = vunpack.c.l.b16 %v312
    %v894 = vunpack.c.h.b16 %v312
    %v895 = vunpack.c.l.b16 %v313
    %v896 = vunpack.c.h.b16 %v313
    %v897 = vunpack.c.l.b16 %v314
    %v898 = vunpack.c.h.b16 %v314
    %v899 = vunpack.c.l.b16 %v315
    %v900 = vunpack.c.h.b16 %v315
    %v901 = vunpack.c.l.b16 %v316
    %v902 = vunpack.c.h.b16 %v316
    %v903 = vunpack.c.l.b16 %v317
    %v904 = vunpack.c.h.b16 %v317
    %v905 = vunpack.c.l.b16 %v318
    %v906 = vunpack.c.h.b16 %v318
    %v907 = vunpack.c.l.b16 %v319
    %v908 = vunpack.c.h.b16 %v319
    %v909 = vunpack.c.l.b16 %v320
    %v910 = vunpack.c.h.b16 %v320
    %v911 = vunpack.c.l.b16 %v321
    %v912 = vunpack.c.h.b16 %v321
    %v913 = vunpack.c.l.b16 %v322
    %v914 = vunpack.c.h.b16 %v322
    %v915 = vunpack.c.l.b16 %v323
    %v916 = vunpack.c.h.b16 %v323
    %v917 = vunpack.c.l.b16 %v324
    %v918 = vunpack.c.h.b16 %v324
    %v919 = vunpack.c.l.b16 %v325
    %v920 = vunpack.c.h.b16 %v325
    %v921 = vunpack.c.l.b16 %v326
    %v922 = vunpack.c.h.b16 %v326
    %v923 = vunpack.c.l.b16 %v327
    %v924 = vunpack.c.h.b16 %v327
    %v925 = vunpack.c.l.b16 %v328
    %v926 = vunpack.c.h.b16 %v328
    %v927 = vunpack.c.l.b16 %v329
    %v928 = vunpack.c.h.b16 %v329
    %v929 = vunpack.c.l.b16 %v330
    %v930 = vunpack.c.h.b16 %v330
    %v931 = vunpack.c.l.b16 %v331
    %v932 = vunpack.c.h.b16 %v331
    %v933 = vunpack.c.l.b16 %v332
    %v934 = vunpack.c.h.b16 %v332
    %v935 = vunpack.c.l.b16 %v333
    %v936 = vunpack.c.h.b16 %v333
    %v937 = vunpack.c.l.b16 %v334
    %v938 = vunpack.c.h.b16 %v334
    %v939 = vunpack.c.l.b16 %v335
    %v940 = vunpack.c.h.b16 %v335
    %v941 = vunpack.c.l.b16 %v336
    %v942 = vunpack.c.h.b16 %v336
    %v943 = vunpack.c.l.b16 %v337
    %v944 = vunpack.c.h.b16 %v337
    %v945 = vunpack.c.l.b16 %v338
    %v946 = vunpack.c.h.b16 %v338
    %v947 = vunpack.c.l.b16 %v339
    %v948 = vunpack.c.h.b16 %v339
    %v949 = vunpack.c.l.b16 %v340
    %v950 = vunpack.c.h.b16 %v340
    %v951 = vpack.c.b16 %v563, %v559
    %v952 = vpack.c.b16 %v564, %v560
    %v953 = vpack.c.b16 %v565, %v561
    %v954 = vpack.c.b16 %v566, %v562
    %v955 = vpack.c.b16 %v571, %v567
    %v956 = vpack.c.b16 %v572, %v568
    %v957 = vpack.c.b16 %v573, %v569
    %v958 = vpack.c.b16 %v574, %v570
    %v959 = vpack.c.b16 %v579, %v575
    %v960 = vpack.c.b16 %v580, %v576
    %v961 = vpack.c.b16 %v581, %v577
    %v962 = vpack.c.b16 %v582, %v578
    %v963 = vpack.c.b16 %v587, %v583
    %v964 = vpack.c.b16 %v588, %v584
    %v965 = vpack.c.b16 %v589, %v585
    %v966 = vpack.c.b16 %v590, %v586
    %v967 = vpack.c.b16 %v595, %v591
    %v968 = vpack.c.b16 %v596, %v592
    %v969 = vpack.c.b16 %v597, %v593
    %v970 = vpack.c.b16 %v598, %v594
    %v971 = vpack.c.b16 %v603, %v599
    %v972 = vpack.c.b16 %v604, %v600
    %v973 = vpack.c.b16 %v605, %v601
    %v974 = vpack.c.b16 %v606, %v602
    %v975 = vpack.c.b16 %v611, %v607
    %v976 = vpack.c.b16 %v612, %v608
    %v977 = vpack.c.b16 %v613, %v609
    %v978 = vpack.c.b16 %v614, %v610
    %v979 = vpack.c.b16 %v619, %v615
    %v980 = vpack.c.b16 %v620, %v616
    %v981 = vpack.c.b16 %v621, %v617
    %v982 = vpack.c.b16 %v622, %v618
    %v983 = vpack.c.b16 %v627, %v623
    %v984 = vpack.c.b16 %v628, %v624
    %v985 = vpack.c.b16 %v629, %v625
    %v986 = vpack.c.b16 %v630, %v626
    %v987 = vpack.c.b16 %v635, %v631
    %v988 = vpack.c.b16 %v636, %v632
    %v989 = vpack.c.b16 %v637, %v633
    %v990 = vpack.c.b16 %v638, %v634
    %v991 = vpack.c.b16 %v643, %v639
    %v992 = vpack.c.b16 %v644, %v640
    %v993 = vpack.c.b16 %v645, %v641
    %v994 = vpack.c.b16 %v646, %v642
    %v995 = vpack.c.b16 %v651, %v647
    %v996 = vpack.c.b16 %v652, %v648
    %v997 = vpack.c.b16 %v653, %v649
    %v998 = vpack.c.b16 %v654, %v650
    %v999 = vpack.c.b16 %v659, %v655
    %v1000 = vpack.c.b16 %v660, %v656
    %v1001 = vpack.c.b16 %v661, %v657
    %v1002 = vpack.c.b16 %v662, %v658
    %v1003 = vpack.c.b16 %v667, %v663
    %v1004 = vpack.c.b16 %v668, %v664
    %v1005 = vpack.c.b16 %v669, %v665
    %v1006 = vpack.c.b16 %v670, %v666
    %v1007 = vpack.c.b16 %v675, %v671
    %v1008 = vpack.c.b16 %v676, %v672
    %v1009 = vpack.c.b16 %v677, %v673
    %v1010 = vpack.c.b16 %v678, %v674
    %v1011 = vpack.c.b16 %v683, %v679
    %v1012 = vpack.c.b16 %v684, %v680
    %v1013 = vpack.c.b16 %v685, %v681
    %v1014 = vpack.c.b16 %v686, %v682
    %v1015 = vpack.c.b16 %v691, %v687
    %v1016 = vpack.c.b16 %v692, %v688
    %v1017 = vpack.c.b16 %v693, %v689
    %v1018 = vpack.c.b16 %v694, %v690
    %v1019 = vpack.c.b16 %v699, %v695
    %v1020 = vpack.c.b16 %v700, %v696
    %v1021 = vpack.c.b16 %v701, %v697
    %v1022 = vpack.c.b16 %v702, %v698
    %v1023 = vpack.c.b16 %v707, %v703
    %v1024 = vpack.c.b16 %v708, %v704
    %v1025 = vpack.c.b16 %v709, %v705
    %v1026 = vpack.c.b16 %v710, %v706
    %v1027 = vpack.c.b16 %v715, %v711
    %v1028 = vpack.c.b16 %v716, %v712
    %v1029 = vpack.c.b16 %v717, %v713
    %v1030 = vpack.c.b16 %v718, %v714
    %v1031 = vpack.c.b16 %v723, %v719
    %v1032 = vpack.c.b16 %v724, %v720
    %v1033 = vpack.c.b16 %v725, %v721
    %v1034 = vpack.c.b16 %v726, %v722
    %v1035 = vpack.c.b16 %v731, %v727
    %v1036 = vpack.c.b16 %v732, %v728
    %v1037 = vpack.c.b16 %v733, %v729
    %v1038 = vpack.c.b16 %v734, %v730
    %v1039 = vpack.c.b16 %v739, %v735
    %v1040 = vpack.c.b16 %v740, %v736
    %v1041 = vpack.c.b16 %v741, %v737
    %v1042 = vpack.c.b16 %v742, %v738
    %v1043 = vpack.c.b16 %v747, %v743
    %v1044 = vpack.c.b16 %v748, %v744
    %v1045 = vpack.c.b16 %v749, %v745
    %v1046 = vpack.c.b16 %v750, %v746
    %v1047 = vpack.c.b16 %v755, %v751
    %v1048 = vpack.c.b16 %v756, %v752
    %v1049 = vpack.c.b16 %v757, %v753
    %v1050 = vpack.c.b16 %v758, %v754
    %v1051 = vpack.c.b16 %v763, %v759
    %v1052 = vpack.c.b16 %v764, %v760
    %v1053 = vpack.c.b16 %v765, %v761
    %v1054 = vpack.c.b16 %v766, %v762
    %v1055 = vpack.c.b16 %v771, %v767
    %v1056 = vpack.c.b16 %v772, %v768
    %v1057 = vpack.c.b16 %v773, %v769
    %v1058 = vpack.c.b16 %v774, %v770
    %v1059 = vpack.c.b16 %v779, %v775
    %v1060 = vpack.c.b16 %v780, %v776
    %v1061 = vpack.c.b16 %v781, %v777
    %v1062 = vpack.c.b16 %v782, %v778
    %v1063 = vpack.c.b16 %v787, %v783
    %v1064 = vpack.c.b16 %v788, %v784
    %v1065 = vpack.c.b16 %v789, %v785
    %v1066 = vpack.c.b16 %v790, %v786
    %v1067 = vpack.c.b16 %v795, %v791
    %v1068 = vpack.c.b16 %v796, %v792
    %v1069 = vpack.c.b16 %v797, %v793
    %v1070 = vpack.c.b16 %v798, %v794
    %v1071 = vpack.c.b16 %v803, %v799
    %v1072 = vpack.c.b16 %v804, %v800
    %v1073 = vpack.c.b16 %v805, %v801
    %v1074 = vpack.c.b16 %v806, %v802
    %v1075 = vpack.c.b16 %v811, %v807
    %v1076 = vpack.c.b16 %v812, %v808
    %v1077 = vpack.c.b16 %v813, %v809
    %v1078 = vpack.c.b16 %v814, %v810
    %v1079 = vpack.c.b16 %v819, %v815
    %v1080 = vpack.c.b16 %v820, %v816
    %v1081 = vpack.c.b16 %v821, %v817
    %v1082 = vpack.c.b16 %v822, %v818
    %v1083 = vpack.c.b16 %v827, %v823
    %v1084 = vpack.c.b16 %v828, %v824
    %v1085 = vpack.c.b16 %v829, %v825
    %v1086 = vpack.c.b16 %v830, %v826
    %v1087 = vpack.c.b16 %v835, %v831
    %v1088 = vpack.c.b16 %v836, %v832
    %v1089 = vpack.c.b16 %v837, %v833
    %v1090 = vpack.c.b16 %v838, %v834
    %v1091 = vpack.c.b16 %v843, %v839
    %v1092 = vpack.c.b16 %v844, %v840
    %v1093 = vpack.c.b16 %v845, %v841
    %v1094 = vpack.c.b16 %v846, %v842
    %v1095 = vpack.c.b16 %v851, %v847
    %v1096 = vpack.c.b16 %v852, %v848
    %v1097 = vpack.c.b16 %v853, %v849
    %v1098 = vpack.c.b16 %v854, %v850
    %v1099 = vpack.c.b16 %v859, %v855
    %v1100 = vpack.c.b16 %v860, %v856
    %v1101 = vpack.c.b16 %v861, %v857
    %v1102 = vpack.c.b16 %v862, %v858
    %v1103 = vpack.c.b16 %v867, %v863
    %v1104 = vpack.c.b16 %v868, %v864
    %v1105 = vpack.c.b16 %v869, %v865
    %v1106 = vpack.c.b16 %v870, %v866
    %v1107 = vpack.c.b16 %v875, %v871
    %v1108 = vpack.c.b16 %v876, %v872
    %v1109 = vpack.c.b16 %v877, %v873
    %v1110 = vpack.c.b16 %v878, %v874
    %v1111 = vpack.c.b16 %v883, %v879
    %v1112 = vpack.c.b16 %v884, %v880
    %v1113 = vpack.c.b16 %v885, %v881
    %v1114 = vpack.c.b16 %v886, %v882
    %v1115 = vpack.c.b16 %v891, %v887
    %v1116 = vpack.c.b16 %v892, %v888
    %v1117 = vpack.c.b16 %v893, %v889
    %v1118 = vpack.c.b16 %v894, %v890
    %v1119 = vpack.c.b16 %v899, %v895
    %v1120 = vpack.c.b16 %v900, %v896
    %v1121 = vpack.c.b16 %v901, %v897
    %v1122 = vpack.c.b16 %v902, %v898
    %v1123 = vpack.c.b16 %v907, %v903
    %v1124 = vpack.c.b16 %v908, %v904
    %v1125 = vpack.c.b16 %v909, %v905
    %v1126 = vpack.c.b16 %v910, %v906
    %v1127 = vpack.c.b16 %v915, %v911
    %v1128 = vpack.c.b16 %v916, %v912
    %v1129 = vpack.c.b16 %v917, %v913
    %v1130 = vpack.c.b16 %v918, %v914
    %v1131 = vpack.c.b16 %v923, %v919
    %v1132 = vpack.c.b16 %v924, %v920
    %v1133 = vpack.c.b16 %v925, %v921
    %v1134 = vpack.c.b16 %v926, %v922
    %v1135 = vpack.c.b16 %v931, %v927
    %v1136 = vpack.c.b16 %v932, %v928
    %v1137 = vpack.c.b16 %v933, %v929
    %v1138 = vpack.c.b16 %v934, %v930
    %v1139 = vpack.c.b16 %v939, %v935
    %v1140 = vpack.c.b16 %v940, %v936
    %v1141 = vpack.c.b16 %v941, %v937
    %v1142 = vpack.c.b16 %v942, %v938
    %v1143 = vpack.c.b16 %v947, %v943
    %v1144 = vpack.c.b16 %v948, %v944
    %v1145 = vpack.c.b16 %v949, %v945
    %v1146 = vpack.c.b16 %v950, %v946
    %vm1343 = vcmask 130048
    %v1345 = vsel %vm1343, %v144, 0
    %1347 = vmatprep.subr.bf16.mxu0 %v980
    %1348 = vmatpush1.bf16.msra.mxu0 %v979
    %1349 = vmatprep.subr.bf16.mxu0 %v976
    %1350 = vmatpush1.bf16.msra.mxu0 %v975
    %1351 = vmatprep.subr.bf16.mxu0 %v972
    %1352 = vmatpush1.bf16.msra.mxu0 %v971
    %1353 = vmatprep.subr.bf16.mxu0 %v968
    %1354 = vmatpush1.bf16.msra.mxu0 %v967
    %1355 = vmatprep.subr.bf16.mxu0 %v964
    %1356 = vmatpush1.bf16.msra.mxu0 %v963
    %1357 = vmatprep.subr.bf16.mxu0 %v960
    %1358 = vmatpush1.bf16.msra.mxu0 %v959
    %1359 = vmatprep.subr.bf16.mxu0 %v956
    %1360 = vmatpush1.bf16.msra.mxu0 %v955
    %1361 = vmatprep.subr.bf16.mxu0 %v952
    %1362 = vmatpush1.bf16.msra.mxu0 %v951
    %1363 = vmatprep.subr.bf16.mxu0 %v1012
    %1364 = vmatpush2.bf16.msra.mxu0 %v1011
    %1365 = vmatprep.subr.bf16.mxu0 %v1008
    %1366 = vmatpush2.bf16.msra.mxu0 %v1007
    %1367 = vmatprep.subr.bf16.mxu0 %v1004
    %1368 = vmatpush2.bf16.msra.mxu0 %v1003
    %1369 = vmatprep.subr.bf16.mxu0 %v1000
    %1370 = vmatpush2.bf16.msra.mxu0 %v999
    %1371 = vmatprep.subr.bf16.mxu0 %v996
    %1372 = vmatpush2.bf16.msra.mxu0 %v995
    %1373 = vmatprep.subr.bf16.mxu0 %v992
    %1374 = vmatpush2.bf16.msra.mxu0 %v991
    %1375 = vmatprep.subr.bf16.mxu0 %v988
    %1376 = vmatpush2.bf16.msra.mxu0 %v987
    %1377 = vmatprep.subr.bf16.mxu0 %v984
    %1378 = vmatpush2.bf16.msra.mxu0 %v983
    %1379 = vmatprep.mubr.bf16.mxu0 %v139
    %1380 = vmatmul.mubr.bf16.gmra.mxu0 %v138
    %v1381 = vpop.f32.mrf.mxu0
    %v1382 = vadd.f32 %v346, %v1381
    %v1383 = vpop.f32.mrf.mxu0
    %v1384 = vadd.f32 %v350, %v1383
    %v1385 = vpop.f32.mrf.mxu0
    %v1386 = vpop.f32.mrf.mxu0
    %1387 = vdwg.mxu0
    %1388 = vmatprep.subr.bf16.mxu0 %v1044
    %1389 = vmatpush1.bf16.msra.mxu0 %v1043
    %1390 = vmatprep.subr.bf16.mxu0 %v1040
    %1391 = vmatpush1.bf16.msra.mxu0 %v1039
    %1392 = vmatprep.subr.bf16.mxu0 %v1036
    %1393 = vmatpush1.bf16.msra.mxu0 %v1035
    %1394 = vmatprep.subr.bf16.mxu0 %v1032
    %1395 = vmatpush1.bf16.msra.mxu0 %v1031
    %1396 = vmatprep.subr.bf16.mxu0 %v1028
    %1397 = vmatpush1.bf16.msra.mxu0 %v1027
    %1398 = vmatprep.subr.bf16.mxu0 %v1024
    %1399 = vmatpush1.bf16.msra.mxu0 %v1023
    %1400 = vmatprep.subr.bf16.mxu0 %v1020
    %1401 = vmatpush1.bf16.msra.mxu0 %v1019
    %1402 = vmatprep.subr.bf16.mxu0 %v1016
    %1403 = vmatpush1.bf16.msra.mxu0 %v1015
    %1404 = vmatprep.subr.bf16.mxu0 %v1076
    %1405 = vmatpush2.bf16.msra.mxu0 %v1075
    %1406 = vmatprep.subr.bf16.mxu0 %v1072
    %1407 = vmatpush2.bf16.msra.mxu0 %v1071
    %1408 = vmatprep.subr.bf16.mxu0 %v1068
    %1409 = vmatpush2.bf16.msra.mxu0 %v1067
    %1410 = vmatprep.subr.bf16.mxu0 %v1064
    %1411 = vmatpush2.bf16.msra.mxu0 %v1063
    %1412 = vmatprep.subr.bf16.mxu0 %v1060
    %1413 = vmatpush2.bf16.msra.mxu0 %v1059
    %1414 = vmatprep.subr.bf16.mxu0 %v1056
    %1415 = vmatpush2.bf16.msra.mxu0 %v1055
    %1416 = vmatprep.subr.bf16.mxu0 %v1052
    %1417 = vmatpush2.bf16.msra.mxu0 %v1051
    %1418 = vmatprep.subr.bf16.mxu0 %v1048
    %1419 = vmatpush2.bf16.msra.mxu0 %v1047
    %1420 = vmatprep.mubr.bf16.mxu0 %v141
    %1421 = vmatmul.mubr.bf16.gmra.mxu0 %v140
    %v1422 = vpop.f32.mrf.mxu0
    %v1423 = vadd.f32 %v1382, %v1422
    %v1424 = vpop.f32.mrf.mxu0
    %v1425 = vadd.f32 %v1384, %v1424
    %v1426 = vpop.f32.mrf.mxu0
    %v1427 = vpop.f32.mrf.mxu0
    %1428 = vdwg.mxu0
    %1429 = vmatprep.subr.bf16.mxu0 %v1108
    %1430 = vmatpush1.bf16.msra.mxu0 %v1107
    %1431 = vmatprep.subr.bf16.mxu0 %v1104
    %1432 = vmatpush1.bf16.msra.mxu0 %v1103
    %1433 = vmatprep.subr.bf16.mxu0 %v1100
    %1434 = vmatpush1.bf16.msra.mxu0 %v1099
    %1435 = vmatprep.subr.bf16.mxu0 %v1096
    %1436 = vmatpush1.bf16.msra.mxu0 %v1095
    %1437 = vmatprep.subr.bf16.mxu0 %v1092
    %1438 = vmatpush1.bf16.msra.mxu0 %v1091
    %1439 = vmatprep.subr.bf16.mxu0 %v1088
    %1440 = vmatpush1.bf16.msra.mxu0 %v1087
    %1441 = vmatprep.subr.bf16.mxu0 %v1084
    %1442 = vmatpush1.bf16.msra.mxu0 %v1083
    %1443 = vmatprep.subr.bf16.mxu0 %v1080
    %1444 = vmatpush1.bf16.msra.mxu0 %v1079
    %1445 = vmatprep.subr.bf16.mxu0 %v1140
    %1446 = vmatpush2.bf16.msra.mxu0 %v1139
    %1447 = vmatprep.subr.bf16.mxu0 %v1136
    %1448 = vmatpush2.bf16.msra.mxu0 %v1135
    %1449 = vmatprep.subr.bf16.mxu0 %v1132
    %1450 = vmatpush2.bf16.msra.mxu0 %v1131
    %1451 = vmatprep.subr.bf16.mxu0 %v1128
    %1452 = vmatpush2.bf16.msra.mxu0 %v1127
    %1453 = vmatprep.subr.bf16.mxu0 %v1124
    %1454 = vmatpush2.bf16.msra.mxu0 %v1123
    %1455 = vmatprep.subr.bf16.mxu0 %v1120
    %1456 = vmatpush2.bf16.msra.mxu0 %v1119
    %1457 = vmatprep.subr.bf16.mxu0 %v1116
    %1458 = vmatpush2.bf16.msra.mxu0 %v1115
    %1459 = vmatprep.subr.bf16.mxu0 %v1112
    %1460 = vmatpush2.bf16.msra.mxu0 %v1111
    %1461 = vmatprep.mubr.bf16.mxu0 %v143
    %1462 = vmatmul.mubr.bf16.gmra.mxu0 %v142
    %v1463 = vpop.f32.mrf.mxu0
    %v1464 = vadd.f32 %v1423, %v1463
    %v1465 = vpop.f32.mrf.mxu0
    %v1466 = vadd.f32 %v1425, %v1465
    %v1467 = vpop.f32.mrf.mxu0
    %v1468 = vpop.f32.mrf.mxu0
    %1469 = vdwg.mxu0
    %1470 = vmatprep.subr.bf16.mxu0 0
    %1471 = vmatpush1.bf16.msra.mxu0 0
    %1472 = vmatprep.subr.bf16.mxu0 0
    %1473 = vmatpush1.bf16.msra.mxu0 0
    %1474 = vmatprep.subr.bf16.mxu0 0
    %1475 = vmatpush1.bf16.msra.mxu0 0
    %1476 = vmatprep.subr.bf16.mxu0 0
    %1477 = vmatpush1.bf16.msra.mxu0 0
    %1478 = vmatprep.subr.bf16.mxu0 0
    %1479 = vmatpush1.bf16.msra.mxu0 0
    %1480 = vmatprep.subr.bf16.mxu0 0
    %1481 = vmatpush1.bf16.msra.mxu0 0
    %1482 = vmatprep.subr.bf16.mxu0 0
    %1483 = vmatpush1.bf16.msra.mxu0 0
    %1484 = vmatprep.subr.bf16.mxu0 %v1144
    %1485 = vmatpush1.bf16.msra.mxu0 %v1143
    %1486 = vmatprep.subr.bf16.mxu0 0
    %1487 = vmatpush2.bf16.msra.mxu0 0
    %1488 = vmatprep.subr.bf16.mxu0 0
    %1489 = vmatpush2.bf16.msra.mxu0 0
    %1490 = vmatprep.subr.bf16.mxu0 0
    %1491 = vmatpush2.bf16.msra.mxu0 0
    %1492 = vmatprep.subr.bf16.mxu0 0
    %1493 = vmatpush2.bf16.msra.mxu0 0
    %1494 = vmatprep.subr.bf16.mxu0 0
    %1495 = vmatpush2.bf16.msra.mxu0 0
    %1496 = vmatprep.subr.bf16.mxu0 0
    %1497 = vmatpush2.bf16.msra.mxu0 0
    %1498 = vmatprep.subr.bf16.mxu0 0
    %1499 = vmatpush2.bf16.msra.mxu0 0
    %1500 = vmatprep.subr.bf16.mxu0 0
    %1501 = vmatpush2.bf16.msra.mxu0 0
    %1502 = vmatprep.mubr.bf16.mxu0 0
    %1503 = vmatmul.mubr.bf16.gmra.mxu0 %v1345
    %v1504 = vpop.f32.mrf.mxu0
    %v1505 = vadd.f32 %v1464, %v1504
    %v1506 = vpop.f32.mrf.mxu0
    %v1507 = vadd.f32 %v1466, %v1506
    %v1508 = vpop.f32.mrf.mxu0
    %v1509 = vpop.f32.mrf.mxu0
    %1510 = vdwg.mxu0
    %1511 = vmatprep.subr.bf16.mxu0 %v982
    %1512 = vmatpush1.bf16.msra.mxu0 %v981
    %1513 = vmatprep.subr.bf16.mxu0 %v978
    %1514 = vmatpush1.bf16.msra.mxu0 %v977
    %1515 = vmatprep.subr.bf16.mxu0 %v974
    %1516 = vmatpush1.bf16.msra.mxu0 %v973
    %1517 = vmatprep.subr.bf16.mxu0 %v970
    %1518 = vmatpush1.bf16.msra.mxu0 %v969
    %1519 = vmatprep.subr.bf16.mxu0 %v966
    %1520 = vmatpush1.bf16.msra.mxu0 %v965
    %1521 = vmatprep.subr.bf16.mxu0 %v962
    %1522 = vmatpush1.bf16.msra.mxu0 %v961
    %1523 = vmatprep.subr.bf16.mxu0 %v958
    %1524 = vmatpush1.bf16.msra.mxu0 %v957
    %1525 = vmatprep.subr.bf16.mxu0 %v954
    %1526 = vmatpush1.bf16.msra.mxu0 %v953
    %1527 = vmatprep.subr.bf16.mxu0 %v1014
    %1528 = vmatpush2.bf16.msra.mxu0 %v1013
    %1529 = vmatprep.subr.bf16.mxu0 %v1010
    %1530 = vmatpush2.bf16.msra.mxu0 %v1009
    %1531 = vmatprep.subr.bf16.mxu0 %v1006
    %1532 = vmatpush2.bf16.msra.mxu0 %v1005
    %1533 = vmatprep.subr.bf16.mxu0 %v1002
    %1534 = vmatpush2.bf16.msra.mxu0 %v1001
    %1535 = vmatprep.subr.bf16.mxu0 %v998
    %1536 = vmatpush2.bf16.msra.mxu0 %v997
    %1537 = vmatprep.subr.bf16.mxu0 %v994
    %1538 = vmatpush2.bf16.msra.mxu0 %v993
    %1539 = vmatprep.subr.bf16.mxu0 %v990
    %1540 = vmatpush2.bf16.msra.mxu0 %v989
    %1541 = vmatprep.subr.bf16.mxu0 %v986
    %1542 = vmatpush2.bf16.msra.mxu0 %v985
    %1543 = vmatprep.mubr.bf16.mxu0 %v139
    %1544 = vmatmul.mubr.bf16.gmra.mxu0 %v138
    %v1545 = vpop.f32.mrf.mxu0
    %v1546 = vadd.f32 %v354, %v1545
    %v1547 = vpop.f32.mrf.mxu0
    %v1548 = vadd.f32 %v358, %v1547
    %v1549 = vpop.f32.mrf.mxu0
    %v1550 = vpop.f32.mrf.mxu0
    %1551 = vdwg.mxu0
    %1552 = vmatprep.subr.bf16.mxu0 %v1046
    %1553 = vmatpush1.bf16.msra.mxu0 %v1045
    %1554 = vmatprep.subr.bf16.mxu0 %v1042
    %1555 = vmatpush1.bf16.msra.mxu0 %v1041
    %1556 = vmatprep.subr.bf16.mxu0 %v1038
    %1557 = vmatpush1.bf16.msra.mxu0 %v1037
    %1558 = vmatprep.subr.bf16.mxu0 %v1034
    %1559 = vmatpush1.bf16.msra.mxu0 %v1033
    %1560 = vmatprep.subr.bf16.mxu0 %v1030
    %1561 = vmatpush1.bf16.msra.mxu0 %v1029
    %1562 = vmatprep.subr.bf16.mxu0 %v1026
    %1563 = vmatpush1.bf16.msra.mxu0 %v1025
    %1564 = vmatprep.subr.bf16.mxu0 %v1022
    %1565 = vmatpush1.bf16.msra.mxu0 %v1021
    %1566 = vmatprep.subr.bf16.mxu0 %v1018
    %1567 = vmatpush1.bf16.msra.mxu0 %v1017
    %1568 = vmatprep.subr.bf16.mxu0 %v1078
    %1569 = vmatpush2.bf16.msra.mxu0 %v1077
    %1570 = vmatprep.subr.bf16.mxu0 %v1074
    %1571 = vmatpush2.bf16.msra.mxu0 %v1073
    %1572 = vmatprep.subr.bf16.mxu0 %v1070
    %1573 = vmatpush2.bf16.msra.mxu0 %v1069
    %1574 = vmatprep.subr.bf16.mxu0 %v1066
    %1575 = vmatpush2.bf16.msra.mxu0 %v1065
    %1576 = vmatprep.subr.bf16.mxu0 %v1062
    %1577 = vmatpush2.bf16.msra.mxu0 %v1061
    %1578 = vmatprep.subr.bf16.mxu0 %v1058
    %1579 = vmatpush2.bf16.msra.mxu0 %v1057
    %1580 = vmatprep.subr.bf16.mxu0 %v1054
    %1581 = vmatpush2.bf16.msra.mxu0 %v1053
    %1582 = vmatprep.subr.bf16.mxu0 %v1050
    %1583 = vmatpush2.bf16.msra.mxu0 %v1049
    %1584 = vmatprep.mubr.bf16.mxu0 %v141
    %1585 = vmatmul.mubr.bf16.gmra.mxu0 %v140
    %v1586 = vpop.f32.mrf.mxu0
    %v1587 = vadd.f32 %v1546, %v1586
    %v1588 = vpop.f32.mrf.mxu0
    %v1589 = vadd.f32 %v1548, %v1588
    %v1590 = vpop.f32.mrf.mxu0
    %v1591 = vpop.f32.mrf.mxu0
    %1592 = vdwg.mxu0
    %1593 = vmatprep.subr.bf16.mxu0 %v1110
    %1594 = vmatpush1.bf16.msra.mxu0 %v1109
    %1595 = vmatprep.subr.bf16.mxu0 %v1106
    %1596 = vmatpush1.bf16.msra.mxu0 %v1105
    %1597 = vmatprep.subr.bf16.mxu0 %v1102
    %1598 = vmatpush1.bf16.msra.mxu0 %v1101
    %1599 = vmatprep.subr.bf16.mxu0 %v1098
    %1600 = vmatpush1.bf16.msra.mxu0 %v1097
    %1601 = vmatprep.subr.bf16.mxu0 %v1094
    %1602 = vmatpush1.bf16.msra.mxu0 %v1093
    %1603 = vmatprep.subr.bf16.mxu0 %v1090
    %1604 = vmatpush1.bf16.msra.mxu0 %v1089
    %1605 = vmatprep.subr.bf16.mxu0 %v1086
    %1606 = vmatpush1.bf16.msra.mxu0 %v1085
    %1607 = vmatprep.subr.bf16.mxu0 %v1082
    %1608 = vmatpush1.bf16.msra.mxu0 %v1081
    %1609 = vmatprep.subr.bf16.mxu0 %v1142
    %1610 = vmatpush2.bf16.msra.mxu0 %v1141
    %1611 = vmatprep.subr.bf16.mxu0 %v1138
    %1612 = vmatpush2.bf16.msra.mxu0 %v1137
    %1613 = vmatprep.subr.bf16.mxu0 %v1134
    %1614 = vmatpush2.bf16.msra.mxu0 %v1133
    %1615 = vmatprep.subr.bf16.mxu0 %v1130
    %1616 = vmatpush2.bf16.msra.mxu0 %v1129
    %1617 = vmatprep.subr.bf16.mxu0 %v1126
    %1618 = vmatpush2.bf16.msra.mxu0 %v1125
    %1619 = vmatprep.subr.bf16.mxu0 %v1122
    %1620 = vmatpush2.bf16.msra.mxu0 %v1121
    %1621 = vmatprep.subr.bf16.mxu0 %v1118
    %1622 = vmatpush2.bf16.msra.mxu0 %v1117
    %1623 = vmatprep.subr.bf16.mxu0 %v1114
    %1624 = vmatpush2.bf16.msra.mxu0 %v1113
    %1625 = vmatprep.mubr.bf16.mxu0 %v143
    %1626 = vmatmul.mubr.bf16.gmra.mxu0 %v142
    %v1627 = vpop.f32.mrf.mxu0
    %v1628 = vadd.f32 %v1587, %v1627
    %v1629 = vpop.f32.mrf.mxu0
    %v1630 = vadd.f32 %v1589, %v1629
    %v1631 = vpop.f32.mrf.mxu0
    %v1632 = vpop.f32.mrf.mxu0
    %1633 = vdwg.mxu0
    %1634 = vmatprep.subr.bf16.mxu0 0
    %1635 = vmatpush1.bf16.msra.mxu0 0
    %1636 = vmatprep.subr.bf16.mxu0 0
    %1637 = vmatpush1.bf16.msra.mxu0 0
    %1638 = vmatprep.subr.bf16.mxu0 0
    %1639 = vmatpush1.bf16.msra.mxu0 0
    %1640 = vmatprep.subr.bf16.mxu0 0
    %1641 = vmatpush1.bf16.msra.mxu0 0
    %1642 = vmatprep.subr.bf16.mxu0 0
    %1643 = vmatpush1.bf16.msra.mxu0 0
    %1644 = vmatprep.subr.bf16.mxu0 0
    %1645 = vmatpush1.bf16.msra.mxu0 0
    %1646 = vmatprep.subr.bf16.mxu0 0
    %1647 = vmatpush1.bf16.msra.mxu0 0
    %1648 = vmatprep.subr.bf16.mxu0 %v1146
    %1649 = vmatpush1.bf16.msra.mxu0 %v1145
    %1650 = vmatprep.subr.bf16.mxu0 0
    %1651 = vmatpush2.bf16.msra.mxu0 0
    %1652 = vmatprep.subr.bf16.mxu0 0
    %1653 = vmatpush2.bf16.msra.mxu0 0
    %1654 = vmatprep.subr.bf16.mxu0 0
    %1655 = vmatpush2.bf16.msra.mxu0 0
    %1656 = vmatprep.subr.bf16.mxu0 0
    %1657 = vmatpush2.bf16.msra.mxu0 0
    %1658 = vmatprep.subr.bf16.mxu0 0
    %1659 = vmatpush2.bf16.msra.mxu0 0
    %1660 = vmatprep.subr.bf16.mxu0 0
    %1661 = vmatpush2.bf16.msra.mxu0 0
    %1662 = vmatprep.subr.bf16.mxu0 0
    %1663 = vmatpush2.bf16.msra.mxu0 0
    %1664 = vmatprep.subr.bf16.mxu0 0
    %1665 = vmatpush2.bf16.msra.mxu0 0
    %1666 = vmatprep.mubr.bf16.mxu0 0
    %1667 = vmatmul.mubr.bf16.gmra.mxu0 %v1345
    %v1668 = vpop.f32.mrf.mxu0
    %v1669 = vadd.f32 %v1628, %v1668
    %v1670 = vpop.f32.mrf.mxu0
    %v1671 = vadd.f32 %v1630, %v1670
    %v1672 = vpop.f32.mrf.mxu0
    %v1673 = vpop.f32.mrf.mxu0
    %1674 = vdwg.mxu0
    %v1675 = vmax.f32 %v1505, 0.0
    %v1676 = vmax.f32 %v1507, 0.0
    %v1677 = vmax.f32 %v1669, 0.0
    %v1678 = vmax.f32 %v1671, 0.0
    %v1679 = vpack.c.bf16 %v1675, %v1675
    %v1680 = vpack.c.bf16 %v1676, %v1676
    %v1681 = vpack.c.bf16 %v1677, %v1677
    %v1682 = vpack.c.bf16 %v1678, %v1678
    %v1683 = vld [vmem:[#allocation8] sm:$0xff]
    %v1684 = vld [vmem:[#allocation8 + $0x8] sm:$0xff]
    %v1685 = vld [vmem:[#allocation8 + $0x10] sm:$0xff]
    %v1686 = vld [vmem:[#allocation8 + $0x18] sm:$0xff]
    %v1687 = vld [vmem:[#allocation8 + $0x20] sm:$0xff]
    %v1688 = vld [vmem:[#allocation8 + $0x28] sm:$0xff]
    %v1689 = vld [vmem:[#allocation8 + $0x30] sm:$0xff]
    %v1690 = vld [vmem:[#allocation8 + $0x38] sm:$0xff]
    %v1691 = vld [vmem:[#allocation8 + $0x40] sm:$0xff]
    %v1692 = vld [vmem:[#allocation8 + $0x48] sm:$0xff]
    %v1693 = vld [vmem:[#allocation8 + $0x50] sm:$0xff]
    %v1694 = vld [vmem:[#allocation8 + $0x58] sm:$0xff]
    %v1695 = vld [vmem:[#allocation8 + $0x60] sm:$0xff]
    %v1696 = vld [vmem:[#allocation8 + $0x68] sm:$0xff]
    %v1697 = vld [vmem:[#allocation8 + $0x70] sm:$0xff]
    %v1698 = vld [vmem:[#allocation8 + $0x78] sm:$0xff]
    %v1699 = vld [vmem:[#allocation8 + $0x80] sm:$0xff]
    %v1700 = vld [vmem:[#allocation8 + $0x88] sm:$0xff]
    %v1701 = vld [vmem:[#allocation8 + $0x90] sm:$0xff]
    %v1702 = vld [vmem:[#allocation8 + $0x98] sm:$0xff]
    %v1703 = vld [vmem:[#allocation8 + $0xa0] sm:$0xff]
    %v1704 = vld [vmem:[#allocation8 + $0xa8] sm:$0xff]
    %v1705 = vld [vmem:[#allocation8 + $0xb0] sm:$0xff]
    %v1706 = vld [vmem:[#allocation8 + $0xb8] sm:$0xff]
    %v1707 = vld [vmem:[#allocation8 + $0xc0] sm:$0xff]
    %v1708 = vld [vmem:[#allocation8 + $0xc8] sm:$0xff]
    %v1709 = vld [vmem:[#allocation8 + $0xd0] sm:$0xff]
    %v1710 = vld [vmem:[#allocation8 + $0xd8] sm:$0xff]
    %v1711 = vld [vmem:[#allocation8 + $0xe0] sm:$0xff]
    %v1712 = vld [vmem:[#allocation8 + $0xe8] sm:$0xff]
    %v1713 = vld [vmem:[#allocation8 + $0xf0] sm:$0xff]
    %v1714 = vld [vmem:[#allocation8 + $0xf8] sm:$0xff]
    %v1715 = vld [vmem:[#allocation8 + $0x100] sm:$0xff]
    %v1716 = vld [vmem:[#allocation8 + $0x108] sm:$0xff]
    %v1717 = vld [vmem:[#allocation8 + $0x110] sm:$0xff]
    %v1718 = vld [vmem:[#allocation8 + $0x118] sm:$0xff]
    %v1719 = vld [vmem:[#allocation8 + $0x120] sm:$0xff]
    %v1720 = vld [vmem:[#allocation8 + $0x128] sm:$0xff]
    %v1721 = vld [vmem:[#allocation8 + $0x130] sm:$0xff]
    %v1722 = vld [vmem:[#allocation8 + $0x138] sm:$0xff]
    %v1723 = vld [vmem:[#allocation8 + $0x140] sm:$0xff]
    %v1724 = vld [vmem:[#allocation8 + $0x148] sm:$0xff]
    %v1725 = vld [vmem:[#allocation8 + $0x150] sm:$0xff]
    %v1726 = vld [vmem:[#allocation8 + $0x158] sm:$0xff]
    %v1727 = vld [vmem:[#allocation8 + $0x160] sm:$0xff]
    %v1728 = vld [vmem:[#allocation8 + $0x168] sm:$0xff]
    %v1729 = vld [vmem:[#allocation8 + $0x170] sm:$0xff]
    %v1730 = vld [vmem:[#allocation8 + $0x178] sm:$0xff]
    %v1731 = vld [vmem:[#allocation8 + $0x180] sm:$0xff]
    %v1732 = vld [vmem:[#allocation8 + $0x188] sm:$0xff]
    %v1733 = vld [vmem:[#allocation8 + $0x190] sm:$0xff]
    %v1734 = vld [vmem:[#allocation8 + $0x198] sm:$0xff]
    %v1735 = vld [vmem:[#allocation8 + $0x1a0] sm:$0xff]
    %v1736 = vld [vmem:[#allocation8 + $0x1a8] sm:$0xff]
    %v1737 = vld [vmem:[#allocation8 + $0x1b0] sm:$0xff]
    %v1738 = vld [vmem:[#allocation8 + $0x1b8] sm:$0xff]
    %v1739 = vld [vmem:[#allocation8 + $0x1c0] sm:$0xff]
    %v1740 = vld [vmem:[#allocation8 + $0x1c8] sm:$0xff]
    %v1741 = vld [vmem:[#allocation8 + $0x1d0] sm:$0xff]
    %v1742 = vld [vmem:[#allocation8 + $0x1d8] sm:$0xff]
    %v1743 = vld [vmem:[#allocation8 + $0x1e0] sm:$0xff]
    %v1744 = vld [vmem:[#allocation8 + $0x1e8] sm:$0xff]
    %v1745 = vld [vmem:[#allocation8 + $0x1f0] sm:$0xff]
    %v1746 = vld [vmem:[#allocation8 + $0x1f8] sm:$0xff]
    %v1747 = vld [vmem:[%s4] sm:$0x3]
    %v1749 = vlaneseq
    %v1750 = vshrl.u32 %v1749, 7
    %v1751 = vsub.s32 0, %v1750
    %v1752 = vrot.slane %v1747, %v1751
    %v1753 = vlaneseq
    %v1754 = vshrl.u32 %v1753, 7
    %v1755 = vsub.s32 1, %v1754
    %v1756 = vrot.slane %v1747, %v1755
    %v1823 = vunpack.c.l.b16 %v1683
    %v1824 = vunpack.c.h.b16 %v1683
    %v1825 = vunpack.c.l.b16 %v1684
    %v1826 = vunpack.c.h.b16 %v1684
    %v1827 = vunpack.c.l.b16 %v1685
    %v1828 = vunpack.c.h.b16 %v1685
    %v1829 = vunpack.c.l.b16 %v1686
    %v1830 = vunpack.c.h.b16 %v1686
    %v1831 = vunpack.c.l.b16 %v1687
    %v1832 = vunpack.c.h.b16 %v1687
    %v1833 = vunpack.c.l.b16 %v1688
    %v1834 = vunpack.c.h.b16 %v1688
    %v1835 = vunpack.c.l.b16 %v1689
    %v1836 = vunpack.c.h.b16 %v1689
    %v1837 = vunpack.c.l.b16 %v1690
    %v1838 = vunpack.c.h.b16 %v1690
    %v1839 = vunpack.c.l.b16 %v1691
    %v1840 = vunpack.c.h.b16 %v1691
    %v1841 = vunpack.c.l.b16 %v1692
    %v1842 = vunpack.c.h.b16 %v1692
    %v1843 = vunpack.c.l.b16 %v1693
    %v1844 = vunpack.c.h.b16 %v1693
    %v1845 = vunpack.c.l.b16 %v1694
    %v1846 = vunpack.c.h.b16 %v1694
    %v1847 = vunpack.c.l.b16 %v1695
    %v1848 = vunpack.c.h.b16 %v1695
    %v1849 = vunpack.c.l.b16 %v1696
    %v1850 = vunpack.c.h.b16 %v1696
    %v1851 = vunpack.c.l.b16 %v1697
    %v1852 = vunpack.c.h.b16 %v1697
    %v1853 = vunpack.c.l.b16 %v1698
    %v1854 = vunpack.c.h.b16 %v1698
    %v1855 = vunpack.c.l.b16 %v1699
    %v1856 = vunpack.c.h.b16 %v1699
    %v1857 = vunpack.c.l.b16 %v1700
    %v1858 = vunpack.c.h.b16 %v1700
    %v1859 = vunpack.c.l.b16 %v1701
    %v1860 = vunpack.c.h.b16 %v1701
    %v1861 = vunpack.c.l.b16 %v1702
    %v1862 = vunpack.c.h.b16 %v1702
    %v1863 = vunpack.c.l.b16 %v1703
    %v1864 = vunpack.c.h.b16 %v1703
    %v1865 = vunpack.c.l.b16 %v1704
    %v1866 = vunpack.c.h.b16 %v1704
    %v1867 = vunpack.c.l.b16 %v1705
    %v1868 = vunpack.c.h.b16 %v1705
    %v1869 = vunpack.c.l.b16 %v1706
    %v1870 = vunpack.c.h.b16 %v1706
    %v1871 = vunpack.c.l.b16 %v1707
    %v1872 = vunpack.c.h.b16 %v1707
    %v1873 = vunpack.c.l.b16 %v1708
    %v1874 = vunpack.c.h.b16 %v1708
    %v1875 = vunpack.c.l.b16 %v1709
    %v1876 = vunpack.c.h.b16 %v1709
    %v1877 = vunpack.c.l.b16 %v1710
    %v1878 = vunpack.c.h.b16 %v1710
    %v1879 = vunpack.c.l.b16 %v1711
    %v1880 = vunpack.c.h.b16 %v1711
    %v1881 = vunpack.c.l.b16 %v1712
    %v1882 = vunpack.c.h.b16 %v1712
    %v1883 = vunpack.c.l.b16 %v1713
    %v1884 = vunpack.c.h.b16 %v1713
    %v1885 = vunpack.c.l.b16 %v1714
    %v1886 = vunpack.c.h.b16 %v1714
    %v1887 = vunpack.c.l.b16 %v1715
    %v1888 = vunpack.c.h.b16 %v1715
    %v1889 = vunpack.c.l.b16 %v1716
    %v1890 = vunpack.c.h.b16 %v1716
    %v1891 = vunpack.c.l.b16 %v1717
    %v1892 = vunpack.c.h.b16 %v1717
    %v1893 = vunpack.c.l.b16 %v1718
    %v1894 = vunpack.c.h.b16 %v1718
    %v1895 = vunpack.c.l.b16 %v1719
    %v1896 = vunpack.c.h.b16 %v1719
    %v1897 = vunpack.c.l.b16 %v1720
    %v1898 = vunpack.c.h.b16 %v1720
    %v1899 = vunpack.c.l.b16 %v1721
    %v1900 = vunpack.c.h.b16 %v1721
    %v1901 = vunpack.c.l.b16 %v1722
    %v1902 = vunpack.c.h.b16 %v1722
    %v1903 = vunpack.c.l.b16 %v1723
    %v1904 = vunpack.c.h.b16 %v1723
    %v1905 = vunpack.c.l.b16 %v1724
    %v1906 = vunpack.c.h.b16 %v1724
    %v1907 = vunpack.c.l.b16 %v1725
    %v1908 = vunpack.c.h.b16 %v1725
    %v1909 = vunpack.c.l.b16 %v1726
    %v1910 = vunpack.c.h.b16 %v1726
    %v1911 = vunpack.c.l.b16 %v1727
    %v1912 = vunpack.c.h.b16 %v1727
    %v1913 = vunpack.c.l.b16 %v1728
    %v1914 = vunpack.c.h.b16 %v1728
    %v1915 = vunpack.c.l.b16 %v1729
    %v1916 = vunpack.c.h.b16 %v1729
    %v1917 = vunpack.c.l.b16 %v1730
    %v1918 = vunpack.c.h.b16 %v1730
    %v1919 = vunpack.c.l.b16 %v1731
    %v1920 = vunpack.c.h.b16 %v1731
    %v1921 = vunpack.c.l.b16 %v1732
    %v1922 = vunpack.c.h.b16 %v1732
    %v1923 = vunpack.c.l.b16 %v1733
    %v1924 = vunpack.c.h.b16 %v1733
    %v1925 = vunpack.c.l.b16 %v1734
    %v1926 = vunpack.c.h.b16 %v1734
    %v1927 = vunpack.c.l.b16 %v1735
    %v1928 = vunpack.c.h.b16 %v1735
    %v1929 = vunpack.c.l.b16 %v1736
    %v1930 = vunpack.c.h.b16 %v1736
    %v1931 = vunpack.c.l.b16 %v1737
    %v1932 = vunpack.c.h.b16 %v1737
    %v1933 = vunpack.c.l.b16 %v1738
    %v1934 = vunpack.c.h.b16 %v1738
    %v1935 = vunpack.c.l.b16 %v1739
    %v1936 = vunpack.c.h.b16 %v1739
    %v1937 = vunpack.c.l.b16 %v1740
    %v1938 = vunpack.c.h.b16 %v1740
    %v1939 = vunpack.c.l.b16 %v1741
    %v1940 = vunpack.c.h.b16 %v1741
    %v1941 = vunpack.c.l.b16 %v1742
    %v1942 = vunpack.c.h.b16 %v1742
    %v1943 = vunpack.c.l.b16 %v1743
    %v1944 = vunpack.c.h.b16 %v1743
    %v1945 = vunpack.c.l.b16 %v1744
    %v1946 = vunpack.c.h.b16 %v1744
    %v1947 = vunpack.c.l.b16 %v1745
    %v1948 = vunpack.c.h.b16 %v1745
    %v1949 = vunpack.c.l.b16 %v1746
    %v1950 = vunpack.c.h.b16 %v1746
    %v1951 = vpack.c.b16 %v1825, %v1823
    %v1952 = vpack.c.b16 %v1826, %v1824
    %v1953 = vpack.c.b16 %v1829, %v1827
    %v1954 = vpack.c.b16 %v1830, %v1828
    %v1955 = vpack.c.b16 %v1833, %v1831
    %v1956 = vpack.c.b16 %v1834, %v1832
    %v1957 = vpack.c.b16 %v1837, %v1835
    %v1958 = vpack.c.b16 %v1838, %v1836
    %v1959 = vpack.c.b16 %v1841, %v1839
    %v1960 = vpack.c.b16 %v1842, %v1840
    %v1961 = vpack.c.b16 %v1845, %v1843
    %v1962 = vpack.c.b16 %v1846, %v1844
    %v1963 = vpack.c.b16 %v1849, %v1847
    %v1964 = vpack.c.b16 %v1850, %v1848
    %v1965 = vpack.c.b16 %v1853, %v1851
    %v1966 = vpack.c.b16 %v1854, %v1852
    %v1967 = vpack.c.b16 %v1857, %v1855
    %v1968 = vpack.c.b16 %v1858, %v1856
    %v1969 = vpack.c.b16 %v1861, %v1859
    %v1970 = vpack.c.b16 %v1862, %v1860
    %v1971 = vpack.c.b16 %v1865, %v1863
    %v1972 = vpack.c.b16 %v1866, %v1864
    %v1973 = vpack.c.b16 %v1869, %v1867
    %v1974 = vpack.c.b16 %v1870, %v1868
    %v1975 = vpack.c.b16 %v1873, %v1871
    %v1976 = vpack.c.b16 %v1874, %v1872
    %v1977 = vpack.c.b16 %v1877, %v1875
    %v1978 = vpack.c.b16 %v1878, %v1876
    %v1979 = vpack.c.b16 %v1881, %v1879
    %v1980 = vpack.c.b16 %v1882, %v1880
    %v1981 = vpack.c.b16 %v1885, %v1883
    %v1982 = vpack.c.b16 %v1886, %v1884
    %v1983 = vpack.c.b16 %v1889, %v1887
    %v1984 = vpack.c.b16 %v1890, %v1888
    %v1985 = vpack.c.b16 %v1893, %v1891
    %v1986 = vpack.c.b16 %v1894, %v1892
    %v1987 = vpack.c.b16 %v1897, %v1895
    %v1988 = vpack.c.b16 %v1898, %v1896
    %v1989 = vpack.c.b16 %v1901, %v1899
    %v1990 = vpack.c.b16 %v1902, %v1900
    %v1991 = vpack.c.b16 %v1905, %v1903
    %v1992 = vpack.c.b16 %v1906, %v1904
    %v1993 = vpack.c.b16 %v1909, %v1907
    %v1994 = vpack.c.b16 %v1910, %v1908
    %v1995 = vpack.c.b16 %v1913, %v1911
    %v1996 = vpack.c.b16 %v1914, %v1912
    %v1997 = vpack.c.b16 %v1917, %v1915
    %v1998 = vpack.c.b16 %v1918, %v1916
    %v1999 = vpack.c.b16 %v1921, %v1919
    %v2000 = vpack.c.b16 %v1922, %v1920
    %v2001 = vpack.c.b16 %v1925, %v1923
    %v2002 = vpack.c.b16 %v1926, %v1924
    %v2003 = vpack.c.b16 %v1929, %v1927
    %v2004 = vpack.c.b16 %v1930, %v1928
    %v2005 = vpack.c.b16 %v1933, %v1931
    %v2006 = vpack.c.b16 %v1934, %v1932
    %v2007 = vpack.c.b16 %v1937, %v1935
    %v2008 = vpack.c.b16 %v1938, %v1936
    %v2009 = vpack.c.b16 %v1941, %v1939
    %v2010 = vpack.c.b16 %v1942, %v1940
    %v2011 = vpack.c.b16 %v1945, %v1943
    %v2012 = vpack.c.b16 %v1946, %v1944
    %v2013 = vpack.c.b16 %v1949, %v1947
    %v2014 = vpack.c.b16 %v1950, %v1948
    %2079 = vmatprep.subr.bf16.mxu0 %v1966
    %2080 = vmatpush1.bf16.msra.mxu0 %v1965
    %2081 = vmatprep.subr.bf16.mxu0 %v1964
    %2082 = vmatpush1.bf16.msra.mxu0 %v1963
    %2083 = vmatprep.subr.bf16.mxu0 %v1962
    %2084 = vmatpush1.bf16.msra.mxu0 %v1961
    %2085 = vmatprep.subr.bf16.mxu0 %v1960
    %2086 = vmatpush1.bf16.msra.mxu0 %v1959
    %2087 = vmatprep.subr.bf16.mxu0 %v1958
    %2088 = vmatpush1.bf16.msra.mxu0 %v1957
    %2089 = vmatprep.subr.bf16.mxu0 %v1956
    %2090 = vmatpush1.bf16.msra.mxu0 %v1955
    %2091 = vmatprep.subr.bf16.mxu0 %v1954
    %2092 = vmatpush1.bf16.msra.mxu0 %v1953
    %2093 = vmatprep.subr.bf16.mxu0 %v1952
    %2094 = vmatpush1.bf16.msra.mxu0 %v1951
    %2095 = vmatprep.subr.bf16.mxu0 %v1982
    %2096 = vmatpush2.bf16.msra.mxu0 %v1981
    %2097 = vmatprep.subr.bf16.mxu0 %v1980
    %2098 = vmatpush2.bf16.msra.mxu0 %v1979
    %2099 = vmatprep.subr.bf16.mxu0 %v1978
    %2100 = vmatpush2.bf16.msra.mxu0 %v1977
    %2101 = vmatprep.subr.bf16.mxu0 %v1976
    %2102 = vmatpush2.bf16.msra.mxu0 %v1975
    %2103 = vmatprep.subr.bf16.mxu0 %v1974
    %2104 = vmatpush2.bf16.msra.mxu0 %v1973
    %2105 = vmatprep.subr.bf16.mxu0 %v1972
    %2106 = vmatpush2.bf16.msra.mxu0 %v1971
    %2107 = vmatprep.subr.bf16.mxu0 %v1970
    %2108 = vmatpush2.bf16.msra.mxu0 %v1969
    %2109 = vmatprep.subr.bf16.mxu0 %v1968
    %2110 = vmatpush2.bf16.msra.mxu0 %v1967
    %2111 = vmatprep.mubr.bf16.mxu0 %v1680
    %2112 = vmatmul.mubr.bf16.gmra.mxu0 %v1679
    %v2113 = vpop.f32.mrf.mxu0
    %v2114 = vadd.f32 %v1752, %v2113
    %v2115 = vpop.f32.mrf.mxu0
    %v2116 = vadd.f32 %v1756, %v2115
    %v2117 = vpop.f32.mrf.mxu0
    %v2118 = vpop.f32.mrf.mxu0
    %2119 = vdwg.mxu0
    %2120 = vmatprep.subr.bf16.mxu0 %v1998
    %2121 = vmatpush1.bf16.msra.mxu0 %v1997
    %2122 = vmatprep.subr.bf16.mxu0 %v1996
    %2123 = vmatpush1.bf16.msra.mxu0 %v1995
    %2124 = vmatprep.subr.bf16.mxu0 %v1994
    %2125 = vmatpush1.bf16.msra.mxu0 %v1993
    %2126 = vmatprep.subr.bf16.mxu0 %v1992
    %2127 = vmatpush1.bf16.msra.mxu0 %v1991
    %2128 = vmatprep.subr.bf16.mxu0 %v1990
    %2129 = vmatpush1.bf16.msra.mxu0 %v1989
    %2130 = vmatprep.subr.bf16.mxu0 %v1988
    %2131 = vmatpush1.bf16.msra.mxu0 %v1987
    %2132 = vmatprep.subr.bf16.mxu0 %v1986
    %2133 = vmatpush1.bf16.msra.mxu0 %v1985
    %2134 = vmatprep.subr.bf16.mxu0 %v1984
    %2135 = vmatpush1.bf16.msra.mxu0 %v1983
    %2136 = vmatprep.subr.bf16.mxu0 %v2014
    %2137 = vmatpush2.bf16.msra.mxu0 %v2013
    %2138 = vmatprep.subr.bf16.mxu0 %v2012
    %2139 = vmatpush2.bf16.msra.mxu0 %v2011
    %2140 = vmatprep.subr.bf16.mxu0 %v2010
    %2141 = vmatpush2.bf16.msra.mxu0 %v2009
    %2142 = vmatprep.subr.bf16.mxu0 %v2008
    %2143 = vmatpush2.bf16.msra.mxu0 %v2007
    %2144 = vmatprep.subr.bf16.mxu0 %v2006
    %2145 = vmatpush2.bf16.msra.mxu0 %v2005
    %2146 = vmatprep.subr.bf16.mxu0 %v2004
    %2147 = vmatpush2.bf16.msra.mxu0 %v2003
    %2148 = vmatprep.subr.bf16.mxu0 %v2002
    %2149 = vmatpush2.bf16.msra.mxu0 %v2001
    %2150 = vmatprep.subr.bf16.mxu0 %v2000
    %2151 = vmatpush2.bf16.msra.mxu0 %v1999
    %2152 = vmatprep.mubr.bf16.mxu0 %v1682
    %2153 = vmatmul.mubr.bf16.gmra.mxu0 %v1681
    %v2154 = vpop.f32.mrf.mxu0
    %v2155 = vadd.f32 %v2114, %v2154
    %v2156 = vpop.f32.mrf.mxu0
    %v2157 = vadd.f32 %v2116, %v2156
    %v2158 = vpop.f32.mrf.mxu0
    %v2159 = vpop.f32.mrf.mxu0
    %2160 = vdwg.mxu0
    %v2161 = vmax.f32 %v2155, 0.0
    %v2162 = vmax.f32 %v2157, 0.0
    %v2163 = vpack.c.bf16 %v2161, %v2161
    %v2164 = vpack.c.bf16 %v2162, %v2162
    %v2165 = vld [vmem:[#allocation10] sm:$0xf]
    %v2166 = vld [vmem:[#allocation10 + $0x4] sm:$0xf]
    %v2167 = vld [vmem:[#allocation10 + $0x8] sm:$0xf]
    %v2168 = vld [vmem:[#allocation10 + $0xc] sm:$0xf]
    %v2169 = vld [vmem:[#allocation10 + $0x10] sm:$0xf]
    %v2170 = vld [vmem:[#allocation10 + $0x14] sm:$0xf]
    %v2171 = vld [vmem:[#allocation10 + $0x18] sm:$0xf]
    %v2172 = vld [vmem:[#allocation10 + $0x1c] sm:$0xf]
    %v2173 = vld [vmem:[#allocation10 + $0x20] sm:$0xf]
    %v2174 = vld [vmem:[#allocation10 + $0x24] sm:$0xf]
    %v2175 = vld [vmem:[#allocation10 + $0x28] sm:$0xf]
    %v2176 = vld [vmem:[#allocation10 + $0x2c] sm:$0xf]
    %v2177 = vld [vmem:[#allocation10 + $0x30] sm:$0xf]
    %v2178 = vld [vmem:[#allocation10 + $0x34] sm:$0xf]
    %v2179 = vld [vmem:[#allocation10 + $0x38] sm:$0xf]
    %v2180 = vld [vmem:[#allocation10 + $0x3c] sm:$0xf]
    %v2181 = vld [vmem:[#allocation10 + $0x40] sm:$0xf]
    %v2182 = vld [vmem:[#allocation10 + $0x44] sm:$0xf]
    %v2183 = vld [vmem:[#allocation10 + $0x48] sm:$0xf]
    %v2184 = vld [vmem:[#allocation10 + $0x4c] sm:$0xf]
    %v2185 = vld [vmem:[#allocation10 + $0x50] sm:$0xf]
    %v2186 = vld [vmem:[#allocation10 + $0x54] sm:$0xf]
    %v2187 = vld [vmem:[#allocation10 + $0x58] sm:$0xf]
    %v2188 = vld [vmem:[#allocation10 + $0x5c] sm:$0xf]
    %v2189 = vld [vmem:[#allocation10 + $0x60] sm:$0xf]
    %v2190 = vld [vmem:[#allocation10 + $0x64] sm:$0xf]
    %v2191 = vld [vmem:[#allocation10 + $0x68] sm:$0xf]
    %v2192 = vld [vmem:[#allocation10 + $0x6c] sm:$0xf]
    %v2193 = vld [vmem:[#allocation10 + $0x70] sm:$0xf]
    %v2194 = vld [vmem:[#allocation10 + $0x74] sm:$0xf]
    %v2195 = vld [vmem:[#allocation10 + $0x78] sm:$0xf]
    %v2196 = vld [vmem:[#allocation10 + $0x7c] sm:$0xf]
    %v2197 = vld [vmem:[%s6] sm:$0x1]
    %v2199 = vlaneseq
    %v2200 = vshrl.u32 %v2199, 7
    %v2201 = vsub.s32 0, %v2200
    %v2202 = vrot.slane %v2197, %v2201
    %v2236 = vunpack.c.l.b16 %v2165
    %v2237 = vunpack.c.l.b16 %v2166
    %v2238 = vunpack.c.l.b16 %v2167
    %v2239 = vunpack.c.l.b16 %v2168
    %v2240 = vunpack.c.l.b16 %v2169
    %v2241 = vunpack.c.l.b16 %v2170
    %v2242 = vunpack.c.l.b16 %v2171
    %v2243 = vunpack.c.l.b16 %v2172
    %v2244 = vunpack.c.l.b16 %v2173
    %v2245 = vunpack.c.l.b16 %v2174
    %v2246 = vunpack.c.l.b16 %v2175
    %v2247 = vunpack.c.l.b16 %v2176
    %v2248 = vunpack.c.l.b16 %v2177
    %v2249 = vunpack.c.l.b16 %v2178
    %v2250 = vunpack.c.l.b16 %v2179
    %v2251 = vunpack.c.l.b16 %v2180
    %v2252 = vunpack.c.l.b16 %v2181
    %v2253 = vunpack.c.l.b16 %v2182
    %v2254 = vunpack.c.l.b16 %v2183
    %v2255 = vunpack.c.l.b16 %v2184
    %v2256 = vunpack.c.l.b16 %v2185
    %v2257 = vunpack.c.l.b16 %v2186
    %v2258 = vunpack.c.l.b16 %v2187
    %v2259 = vunpack.c.l.b16 %v2188
    %v2260 = vunpack.c.l.b16 %v2189
    %v2261 = vunpack.c.l.b16 %v2190
    %v2262 = vunpack.c.l.b16 %v2191
    %v2263 = vunpack.c.l.b16 %v2192
    %v2264 = vunpack.c.l.b16 %v2193
    %v2265 = vunpack.c.l.b16 %v2194
    %v2266 = vunpack.c.l.b16 %v2195
    %v2267 = vunpack.c.l.b16 %v2196
    %v2268 = vpack.c.b16 %v2237, %v2236
    %v2269 = vpack.c.b16 %v2239, %v2238
    %v2270 = vpack.c.b16 %v2241, %v2240
    %v2271 = vpack.c.b16 %v2243, %v2242
    %v2272 = vpack.c.b16 %v2245, %v2244
    %v2273 = vpack.c.b16 %v2247, %v2246
    %v2274 = vpack.c.b16 %v2249, %v2248
    %v2275 = vpack.c.b16 %v2251, %v2250
    %v2276 = vpack.c.b16 %v2253, %v2252
    %v2277 = vpack.c.b16 %v2255, %v2254
    %v2278 = vpack.c.b16 %v2257, %v2256
    %v2279 = vpack.c.b16 %v2259, %v2258
    %v2280 = vpack.c.b16 %v2261, %v2260
    %v2281 = vpack.c.b16 %v2263, %v2262
    %v2282 = vpack.c.b16 %v2265, %v2264
    %v2283 = vpack.c.b16 %v2267, %v2266
    %2300 = vmatprep.subr.bf16.mxu0 0
    %2301 = vmatpush1.bf16.msra.mxu0 %v2275
    %2302 = vmatprep.subr.bf16.mxu0 0
    %2303 = vmatpush1.bf16.msra.mxu0 %v2274
    %2304 = vmatprep.subr.bf16.mxu0 0
    %2305 = vmatpush1.bf16.msra.mxu0 %v2273
    %2306 = vmatprep.subr.bf16.mxu0 0
    %2307 = vmatpush1.bf16.msra.mxu0 %v2272
    %2308 = vmatprep.subr.bf16.mxu0 0
    %2309 = vmatpush1.bf16.msra.mxu0 %v2271
    %2310 = vmatprep.subr.bf16.mxu0 0
    %2311 = vmatpush1.bf16.msra.mxu0 %v2270
    %2312 = vmatprep.subr.bf16.mxu0 0
    %2313 = vmatpush1.bf16.msra.mxu0 %v2269
    %2314 = vmatprep.subr.bf16.mxu0 0
    %2315 = vmatpush1.bf16.msra.mxu0 %v2268
    %2316 = vmatprep.subr.bf16.mxu0 0
    %2317 = vmatpush2.bf16.msra.mxu0 %v2283
    %2318 = vmatprep.subr.bf16.mxu0 0
    %2319 = vmatpush2.bf16.msra.mxu0 %v2282
    %2320 = vmatprep.subr.bf16.mxu0 0
    %2321 = vmatpush2.bf16.msra.mxu0 %v2281
    %2322 = vmatprep.subr.bf16.mxu0 0
    %2323 = vmatpush2.bf16.msra.mxu0 %v2280
    %2324 = vmatprep.subr.bf16.mxu0 0
    %2325 = vmatpush2.bf16.msra.mxu0 %v2279
    %2326 = vmatprep.subr.bf16.mxu0 0
    %2327 = vmatpush2.bf16.msra.mxu0 %v2278
    %2328 = vmatprep.subr.bf16.mxu0 0
    %2329 = vmatpush2.bf16.msra.mxu0 %v2277
    %2330 = vmatprep.subr.bf16.mxu0 0
    %2331 = vmatpush2.bf16.msra.mxu0 %v2276
    %2332 = vmatprep.mubr.bf16.mxu0 %v2164
    %2333 = vmatmul.mubr.bf16.gmra.mxu0 %v2163
    %v2334 = vpop.f32.mrf.mxu0
    %v2335 = vadd.f32 %v2202, %v2334
    %v2336 = vpop.f32.mrf.mxu0
    %v2337 = vpop.f32.mrf.mxu0
    %v2338 = vpop.f32.mrf.mxu0
    %2339 = vdwg.mxu0
    %v2340 = vmax.f32 %v2335, 0.0
    %v2341 = vpack.c.bf16 %v2340, %v2340
    %v2342 = vld [vmem:[#allocation11] sm:$0xf]
    %v2343 = vld [vmem:[#allocation11 + $0x4] sm:$0xf]
    %v2344 = vld [vmem:[#allocation11 + $0x8] sm:$0xf]
    %v2345 = vld [vmem:[#allocation11 + $0xc] sm:$0xf]
    %v2346 = vld [vmem:[#allocation11 + $0x10] sm:$0xf]
    %v2347 = vld [vmem:[#allocation11 + $0x14] sm:$0xf]
    %v2348 = vld [vmem:[#allocation11 + $0x18] sm:$0xf]
    %v2349 = vld [vmem:[#allocation11 + $0x1c] sm:$0xf]
    %v2350 = vld [vmem:[#allocation11 + $0x20] sm:$0xf]
    %v2351 = vld [vmem:[#allocation11 + $0x24] sm:$0xf]
    %v2352 = vld [vmem:[#allocation11 + $0x28] sm:$0xf]
    %v2353 = vld [vmem:[#allocation11 + $0x2c] sm:$0xf]
    %v2354 = vld [vmem:[#allocation11 + $0x30] sm:$0xf]
    %v2355 = vld [vmem:[#allocation11 + $0x34] sm:$0xf]
    %v2356 = vld [vmem:[#allocation11 + $0x38] sm:$0xf]
    %v2357 = vld [vmem:[#allocation11 + $0x3c] sm:$0xf]
    %v2358 = vld [vmem:[%s8] sm:$0x1]
    %v2360 = vlaneseq
    %v2361 = vshrl.u32 %v2360, 7
    %v2362 = vsub.s32 0, %v2361
    %v2363 = vrot.slane %v2358, %v2362
    %v2381 = vunpack.c.l.b16 %v2342
    %v2382 = vunpack.c.l.b16 %v2343
    %v2383 = vunpack.c.l.b16 %v2344
    %v2384 = vunpack.c.l.b16 %v2345
    %v2385 = vunpack.c.l.b16 %v2346
    %v2386 = vunpack.c.l.b16 %v2347
    %v2387 = vunpack.c.l.b16 %v2348
    %v2388 = vunpack.c.l.b16 %v2349
    %v2389 = vunpack.c.l.b16 %v2350
    %v2390 = vunpack.c.l.b16 %v2351
    %v2391 = vunpack.c.l.b16 %v2352
    %v2392 = vunpack.c.l.b16 %v2353
    %v2393 = vunpack.c.l.b16 %v2354
    %v2394 = vunpack.c.l.b16 %v2355
    %v2395 = vunpack.c.l.b16 %v2356
    %v2396 = vunpack.c.l.b16 %v2357
    %v2397 = vpack.c.b16 %v2382, %v2381
    %v2398 = vpack.c.b16 %v2384, %v2383
    %v2399 = vpack.c.b16 %v2386, %v2385
    %v2400 = vpack.c.b16 %v2388, %v2387
    %v2401 = vpack.c.b16 %v2390, %v2389
    %v2402 = vpack.c.b16 %v2392, %v2391
    %v2403 = vpack.c.b16 %v2394, %v2393
    %v2404 = vpack.c.b16 %v2396, %v2395
    %2413 = vmatprep.subr.bf16.mxu0 0
    %2414 = vmatpush1.bf16.msra.mxu0 %v2404
    %2415 = vmatprep.subr.bf16.mxu0 0
    %2416 = vmatpush1.bf16.msra.mxu0 %v2403
    %2417 = vmatprep.subr.bf16.mxu0 0
    %2418 = vmatpush1.bf16.msra.mxu0 %v2402
    %2419 = vmatprep.subr.bf16.mxu0 0
    %2420 = vmatpush1.bf16.msra.mxu0 %v2401
    %2421 = vmatprep.subr.bf16.mxu0 0
    %2422 = vmatpush1.bf16.msra.mxu0 %v2400
    %2423 = vmatprep.subr.bf16.mxu0 0
    %2424 = vmatpush1.bf16.msra.mxu0 %v2399
    %2425 = vmatprep.subr.bf16.mxu0 0
    %2426 = vmatpush1.bf16.msra.mxu0 %v2398
    %2427 = vmatprep.subr.bf16.mxu0 0
    %2428 = vmatpush1.bf16.msra.mxu0 %v2397
    %2429 = vmatprep.subr.bf16.mxu0 0
    %2430 = vmatpush2.bf16.msra.mxu0 0
    %2431 = vmatprep.subr.bf16.mxu0 0
    %2432 = vmatpush2.bf16.msra.mxu0 0
    %2433 = vmatprep.subr.bf16.mxu0 0
    %2434 = vmatpush2.bf16.msra.mxu0 0
    %2435 = vmatprep.subr.bf16.mxu0 0
    %2436 = vmatpush2.bf16.msra.mxu0 0
    %2437 = vmatprep.subr.bf16.mxu0 0
    %2438 = vmatpush2.bf16.msra.mxu0 0
    %2439 = vmatprep.subr.bf16.mxu0 0
    %2440 = vmatpush2.bf16.msra.mxu0 0
    %2441 = vmatprep.subr.bf16.mxu0 0
    %2442 = vmatpush2.bf16.msra.mxu0 0
    %2443 = vmatprep.subr.bf16.mxu0 0
    %2444 = vmatpush2.bf16.msra.mxu0 0
    %2445 = vmatprep.mubr.bf16.mxu0 0
    %2446 = vmatmul.mubr.bf16.gmra.mxu0 %v2341
    %v2447 = vpop.f32.mrf.mxu0
    %v2448 = vadd.f32 %v2363, %v2447
    %v2449 = vpop.f32.mrf.mxu0
    %v2450 = vpop.f32.mrf.mxu0
    %v2451 = vpop.f32.mrf.mxu0
    %2452 = vdwg.mxu0
    %v2453 = vmax.f32 %v2448, 0.0
    %v2454 = vpack.c.bf16 %v2453, %v2453
    %v2455 = vld [vmem:[#allocation13] sm:$0xf]
    %v2456 = vld [vmem:[#allocation13 + $0x4] sm:$0xf]
    %v2457 = vld [vmem:[#allocation13 + $0x8] sm:$0xf]
    %v2458 = vld [vmem:[#allocation13 + $0xc] sm:$0xf]
    %v2459 = vld [vmem:[#allocation13 + $0x10] sm:$0xf]
    %v2460 = vld [vmem:[#allocation13 + $0x14] sm:$0xf]
    %v2461 = vld [vmem:[#allocation13 + $0x18] sm:$0xf]
    %v2462 = vld [vmem:[#allocation13 + $0x1c] sm:$0xf]
    %v2463 = vld [vmem:[#allocation13 + $0x20] sm:$0xf]
    %v2464 = vld [vmem:[#allocation13 + $0x24] sm:$0xf]
    %v2465 = vld [vmem:[#allocation13 + $0x28] sm:$0xf]
    %v2466 = vld [vmem:[#allocation13 + $0x2c] sm:$0xf]
    %v2467 = vld [vmem:[#allocation13 + $0x30] sm:$0xf]
    %v2468 = vld [vmem:[#allocation13 + $0x34] sm:$0xf]
    %v2469 = vld [vmem:[#allocation13 + $0x38] sm:$0xf]
    %v2470 = vld [vmem:[#allocation13 + $0x3c] sm:$0xf]
    %v2471 = vld [vmem:[%s10] sm:$0x1]
    %v2473 = vlaneseq
    %v2474 = vshrl.u32 %v2473, 7
    %v2475 = vsub.s32 0, %v2474
    %v2476 = vrot.slane %v2471, %v2475
    %v2494 = vunpack.c.l.b16 %v2455
    %v2495 = vunpack.c.l.b16 %v2456
    %v2496 = vunpack.c.l.b16 %v2457
    %v2497 = vunpack.c.l.b16 %v2458
    %v2498 = vunpack.c.l.b16 %v2459
    %v2499 = vunpack.c.l.b16 %v2460
    %v2500 = vunpack.c.l.b16 %v2461
    %v2501 = vunpack.c.l.b16 %v2462
    %v2502 = vunpack.c.l.b16 %v2463
    %v2503 = vunpack.c.l.b16 %v2464
    %v2504 = vunpack.c.l.b16 %v2465
    %v2505 = vunpack.c.l.b16 %v2466
    %v2506 = vunpack.c.l.b16 %v2467
    %v2507 = vunpack.c.l.b16 %v2468
    %v2508 = vunpack.c.l.b16 %v2469
    %v2509 = vunpack.c.l.b16 %v2470
    %v2510 = vpack.c.b16 %v2495, %v2494
    %v2511 = vpack.c.b16 %v2497, %v2496
    %v2512 = vpack.c.b16 %v2499, %v2498
    %v2513 = vpack.c.b16 %v2501, %v2500
    %v2514 = vpack.c.b16 %v2503, %v2502
    %v2515 = vpack.c.b16 %v2505, %v2504
    %v2516 = vpack.c.b16 %v2507, %v2506
    %v2517 = vpack.c.b16 %v2509, %v2508
    %2526 = vmatprep.subr.bf16.mxu0 0
    %2527 = vmatpush1.bf16.msra.mxu0 %v2517
    %2528 = vmatprep.subr.bf16.mxu0 0
    %2529 = vmatpush1.bf16.msra.mxu0 %v2516
    %2530 = vmatprep.subr.bf16.mxu0 0
    %2531 = vmatpush1.bf16.msra.mxu0 %v2515
    %2532 = vmatprep.subr.bf16.mxu0 0
    %2533 = vmatpush1.bf16.msra.mxu0 %v2514
    %2534 = vmatprep.subr.bf16.mxu0 0
    %2535 = vmatpush1.bf16.msra.mxu0 %v2513
    %2536 = vmatprep.subr.bf16.mxu0 0
    %2537 = vmatpush1.bf16.msra.mxu0 %v2512
    %2538 = vmatprep.subr.bf16.mxu0 0
    %2539 = vmatpush1.bf16.msra.mxu0 %v2511
    %2540 = vmatprep.subr.bf16.mxu0 0
    %2541 = vmatpush1.bf16.msra.mxu0 %v2510
    %2542 = vmatprep.subr.bf16.mxu0 0
    %2543 = vmatpush2.bf16.msra.mxu0 0
    %2544 = vmatprep.subr.bf16.mxu0 0
    %2545 = vmatpush2.bf16.msra.mxu0 0
    %2546 = vmatprep.subr.bf16.mxu0 0
    %2547 = vmatpush2.bf16.msra.mxu0 0
    %2548 = vmatprep.subr.bf16.mxu0 0
    %2549 = vmatpush2.bf16.msra.mxu0 0
    %2550 = vmatprep.subr.bf16.mxu0 0
    %2551 = vmatpush2.bf16.msra.mxu0 0
    %2552 = vmatprep.subr.bf16.mxu0 0
    %2553 = vmatpush2.bf16.msra.mxu0 0
    %2554 = vmatprep.subr.bf16.mxu0 0
    %2555 = vmatpush2.bf16.msra.mxu0 0
    %2556 = vmatprep.subr.bf16.mxu0 0
    %2557 = vmatpush2.bf16.msra.mxu0 0
    %2558 = vmatprep.mubr.bf16.mxu0 0
    %2559 = vmatmul.mubr.bf16.gmra.mxu0 %v2454
    %v2560 = vpop.f32.mrf.mxu0
    %v2561 = vadd.f32 %v2476, %v2560
    %v2562 = vpop.f32.mrf.mxu0
    %v2563 = vpop.f32.mrf.mxu0
    %v2564 = vpop.f32.mrf.mxu0
    %2565 = vdwg.mxu0
    %2566 = vst [vmem:[#allocation14] sm:$0xff] %v2561
    // Predicated region
    $region74: #{tpu_custom_call.1} parent=1 // pred_check
      _
    $region75: #{tpu_custom_call.1} parent=1 // pred_check_branch
      %2568 = sbr.rel (0) target = $region77
    $region76: #{tpu_custom_call.1} parent=1 // pred_region
      %s2570 = ssub.s32 128, 128
      %2571 = vsyncadd [#allocation4], %s2570
      %s2573 = sshll.u32 [#allocation14], 4
      %s2574 = int_to_ptr.vmem [resolvable:$true] %s2573
      %2576 = dma.vmem_to_hbm [thread:$0]  %s2574, 128, %s11, [#allocation4]
    $region77: #{tpu_custom_call.1} parent=1 // pred_fallthru
      _
    // Predicated region
    $region78: #{tpu_custom_call.1} parent=1 // pred_check
      _
    $region79: #{tpu_custom_call.1} parent=1 // pred_check_branch
      %2578 = sbr.rel (0) target = $region81
    $region80: #{tpu_custom_call.1} parent=1 // pred_region
      %2579 = dma.done [#allocation4], 128
    $region81: #{tpu_custom_call.1} parent=1 // pred_fallthru
      _
    %2580 = vsyncpa [#allocation3], 1
    %2581 = vsyncpa [#allocation6], 1
    %2582 = vsyncpa [#allocation9], 1
    %2583 = vsyncpa [#allocation12], 1
    %2584 = vsyncpa [#allocation4], 1

</llo_original>
